<compile_context>
chip_gen: v5e
topology: v5e:2x2
jax: 0.10.0
libtpu: 0.0.40
codegen_flags: <defaults>
</compile_context>

<pallas_src>
import functools

import jax
import jax.numpy as jnp
import numpy as np
from jax import lax
from jax.experimental import pallas as pl
from jax.experimental.pallas import tpu as pltpu


# ---------------------------------------------------------------------------
# Kernel 1: fused node projection   proj = h @ [Wa|Wb|Wd|We] + [ba|bb|bd|be]
# ---------------------------------------------------------------------------
def _node_proj_kernel(h_ref, w_ref, b_ref, proj_ref):
    proj_ref[...] = (
        jnp.dot(h_ref[...], w_ref[...], preferred_element_type=jnp.float32)
        + b_ref[...]
    )


# ---------------------------------------------------------------------------
# Kernel 2: edge phase (per edge tile, sequential over tiles)
#   - Ce = e @ Wc + bc                          (MXU)
#   - index gather of proj rows at src/dst      (O(tile) row copies)
#   - e_new, sigma, msg                         (VPU/EUP, vectorized over tile)
#   - index scatter-add of [msg|sigma] into a resident [N, 2*Do] accumulator
#   - running BatchNorm sum / sum-of-squares for e_new
# ---------------------------------------------------------------------------
def _edge_kernel(src_ref, dst_ref,                 # scalar-prefetch (SMEM)
                 e_ref, proj_ref, wc_ref, bc_ref,  # inputs
                 e_new_ref, agg_ref, estats_ref,   # outputs
                 gsrc_ref, gdst_ref, cat_ref,      # VMEM scratch
                 *, te, e_true, do):
    t = pl.program_id(0)
    base = t * te

    @pl.when(t == 0)
    def _init():
        agg_ref[...] = jnp.zeros_like(agg_ref)
        estats_ref[...] = jnp.zeros_like(estats_ref)

    # ---- index-based gather of lane-dense [1, 4*Do] projection rows ----
    def _gather_body(i, c):
        s = src_ref[base + i]
        d = dst_ref[base + i]
        gsrc_ref[pl.ds(i, 1), :] = proj_ref[pl.ds(s, 1), :]
        gdst_ref[pl.ds(i, 1), :] = proj_ref[pl.ds(d, 1), :]
        return c

    lax.fori_loop(0, te, _gather_body, 0)

    ce = (
        jnp.dot(e_ref[...], wc_ref[...], preferred_element_type=jnp.float32)
        + bc_ref[...]
    )

    gsrc = gsrc_ref[...]                      # [te, 4*Do]  (Ah|Bh|Dh|Eh at src)
    gdst = gdst_ref[...]                      # [te, 4*Do]  (... at dst)
    bh_src = gsrc[:, do:2 * do]
    dh_src = gsrc[:, 2 * do:3 * do]
    eh_dst = gdst[:, 3 * do:4 * do]

    e_new = dh_src + eh_dst + ce              # [te, Do]
    sigma = jax.nn.sigmoid(e_new)
    msg = bh_src * sigma
    e_new_ref[...] = e_new

    # ---- running BN statistics for e (mask padded edge rows) ----
    rows = base + lax.broadcasted_iota(jnp.int32, (te, 1), 0)
    maskf = (rows < e_true).astype(jnp.float32)
    em = e_new * maskf
    estats_ref[0:1, :] += jnp.sum(em, axis=0, keepdims=True)
    estats_ref[1:2, :] += jnp.sum(em * e_new, axis=0, keepdims=True)

    # ---- stage [msg | sigma] and index scatter-add over destination nodes ----
    cat_ref[:, 0:do] = msg
    cat_ref[:, do:2 * do] = sigma

    def _scatter_body(i, c):
        @pl.when(base + i < e_true)           # skip padded edges
        def _():
            d = dst_ref[base + i]
            agg_ref[pl.ds(d, 1), :] = (
                agg_ref[pl.ds(d, 1), :] + cat_ref[pl.ds(i, 1), :]
            )
        return c

    lax.fori_loop(0, te, _scatter_body, 0)


# ---------------------------------------------------------------------------
# Kernel 3: node finalize, two-phase grid (phase is the SLOW grid axis)
#   phase 0: compute h_new per tile, accumulate BN sum / sum-of-squares
#   phase 1: recompute h_new, normalize with global stats, ReLU, residual
# ---------------------------------------------------------------------------
def _node_final_kernel(proj_ref, agg_ref, h_ref, g_ref, b_ref,
                       out_ref, stats_ref,
                       *, tn, n_true, do, residual):
    phase = pl.program_id(0)
    i = pl.program_id(1)

    ah = proj_ref[:, 0:do]
    sum_sigma_h = agg_ref[:, 0:do]
    sum_sigma = agg_ref[:, do:2 * do]
    h_new = ah + sum_sigma_h / (sum_sigma + 1e-6)

    @pl.when(phase == 0)
    def _accumulate():
        @pl.when(i == 0)
        def _():
            stats_ref[...] = jnp.zeros_like(stats_ref)
        rows = i * tn + lax.broadcasted_iota(jnp.int32, (tn, 1), 0)
        maskf = (rows < n_true).astype(jnp.float32)
        hm = h_new * maskf
        stats_ref[0:1, :] += jnp.sum(hm, axis=0, keepdims=True)
        stats_ref[1:2, :] += jnp.sum(hm * h_new, axis=0, keepdims=True)
        out_ref[...] = h_new                  # placeholder; overwritten in phase 1

    @pl.when(phase == 1)
    def _finalize():
        inv_n = 1.0 / float(n_true)
        mean = stats_ref[0:1, :] * inv_n
        var = stats_ref[1:2, :] * inv_n - mean * mean
        act = (h_new - mean) * lax.rsqrt(var + 1e-5) * g_ref[...] + b_ref[...]
        act = jnp.maximum(act, 0.0)
        if residual:
            act = h_ref[...] + act
        out_ref[...] = act


# ---------------------------------------------------------------------------
# Kernel 4: edge finalize (embarrassingly parallel over edge tiles)
# ---------------------------------------------------------------------------
def _edge_final_kernel(e_new_ref, e_ref, stats_ref, g_ref, b_ref, out_ref,
                       *, e_true, residual):
    inv_e = 1.0 / float(e_true)
    mean = stats_ref[0:1, :] * inv_e
    var = stats_ref[1:2, :] * inv_e - mean * mean
    act = (e_new_ref[...] - mean) * lax.rsqrt(var + 1e-5) * g_ref[...] + b_ref[...]
    act = jnp.maximum(act, 0.0)
    if residual:
        act = e_ref[...] + act
    out_ref[...] = act


# ---------------------------------------------------------------------------
# Wrapper
# ---------------------------------------------------------------------------
def res_gated_graph_conv(h, e, src, dst, params, *, node_tile=8, edge_tile=16):
    f32 = jnp.float32
    N, Din = h.shape
    E = e.shape[0]
    Do = params["wa"].shape[1]
    residual = (Din == Do)

    # Glue: fuse the four node projections into one lane-dense weight slab.
    w_cat = jnp.concatenate(
        [params["wa"], params["wb"], params["wd"], params["we"]], axis=1)   # [Din, 4*Do]
    b_cat = jnp.concatenate(
        [params["ba"], params["bb"], params["bd"], params["be"]], axis=1)   # [1, 4*Do]

    tn, te = node_tile, edge_tile
    Np = -(-N // tn) * tn
    Ep = -(-E // te) * te
    n_node_tiles = Np // tn
    n_edge_tiles = Ep // te

    h_p = jnp.pad(h.astype(f32), ((0, Np - N), (0, 0)))
    e_p = jnp.pad(e.astype(f32), ((0, Ep - E), (0, 0)))
    src_p = jnp.pad(src.astype(jnp.int32), (0, Ep - E))
    dst_p = jnp.pad(dst.astype(jnp.int32), (0, Ep - E))

    def cp(sem):
        return pltpu.CompilerParams(dimension_semantics=sem,
                                    vmem_limit_bytes=64 * 1024 * 1024)

    # ---- 1) fused node projections: proj = [Ah | Bh | Dh | Eh] ----
    proj = pl.pallas_call(
        _node_proj_kernel,
        out_shape=jax.ShapeDtypeStruct((Np, 4 * Do), f32),
        grid=(n_node_tiles,),
        in_specs=[
            pl.BlockSpec((tn, Din), lambda i: (i, 0)),
            pl.BlockSpec((Din, 4 * Do), lambda i: (0, 0)),
            pl.BlockSpec((1, 4 * Do), lambda i: (0, 0)),
        ],
        out_specs=pl.BlockSpec((tn, 4 * Do), lambda i: (i, 0)),
        compiler_params=cp(("parallel",)),
    )(h_p, w_cat, b_cat)

    # ---- 2) edge phase: index gather / gate / index scatter-add / BN stats(e) ----
    edge_cost = pl.CostEstimate(
        flops=int(2 * Ep * Din * Do + 10 * Ep * Do),
        transcendentals=int(Ep * Do),
        bytes_accessed=int(4 * (Ep * Din + Np * 4 * Do + Ep * Do + Np * 2 * Do) + 8 * Ep),
    )
    kernel_b = functools.partial(_edge_kernel, te=te, e_true=E, do=Do)
    e_new, agg, e_stats = pl.pallas_call(
        kernel_b,
        out_shape=(
            jax.ShapeDtypeStruct((Ep, Do), f32),        # e_new (pre-BN edge feats)
            jax.ShapeDtypeStruct((Np, 2 * Do), f32),    # [sum_sigma_h | sum_sigma]
            jax.ShapeDtypeStruct((2, Do), f32),         # [sum(e_new); sum(e_new^2)]
        ),
        grid_spec=pltpu.PrefetchScalarGridSpec(
            num_scalar_prefetch=2,                      # src, dst -> SMEM
            grid=(n_edge_tiles,),
            in_specs=[
                pl.BlockSpec((te, Din), lambda t, s, d: (t, 0)),     # e tile
                pl.BlockSpec((Np, 4 * Do), lambda t, s, d: (0, 0)),  # proj (resident)
                pl.BlockSpec((Din, Do), lambda t, s, d: (0, 0)),     # Wc
                pl.BlockSpec((1, Do), lambda t, s, d: (0, 0)),       # bc
            ],
            out_specs=[
                pl.BlockSpec((te, Do), lambda t, s, d: (t, 0)),
                pl.BlockSpec((Np, 2 * Do), lambda t, s, d: (0, 0)),  # accumulator
                pl.BlockSpec((2, Do), lambda t, s, d: (0, 0)),       # accumulator
            ],
            scratch_shapes=[
                pltpu.VMEM((te, 4 * Do), f32),   # gathered proj rows @ src
                pltpu.VMEM((te, 4 * Do), f32),   # gathered proj rows @ dst
                pltpu.VMEM((te, 2 * Do), f32),   # [msg | sigma] staging
            ],
        ),
        compiler_params=cp(("arbitrary",)),
        cost_estimate=edge_cost,
    )(src_p, dst_p, e_p, proj, params["wc"], params["bc"])

    # ---- 3) node finalize: two-phase cross-tile BN + ReLU + residual ----
    kernel_c = functools.partial(_node_final_kernel, tn=tn, n_true=N, do=Do,
                                 residual=residual)
    h_out = pl.pallas_call(
        kernel_c,
        out_shape=jax.ShapeDtypeStruct((Np, Do), f32),
        grid=(2, n_node_tiles),                       # phase (slow), node tile (fast)
        in_specs=[
            pl.BlockSpec((tn, 4 * Do), lambda p, i: (i, 0)),
            pl.BlockSpec((tn, 2 * Do), lambda p, i: (i, 0)),
            pl.BlockSpec((tn, Din), lambda p, i: (i, 0)),
            pl.BlockSpec((1, Do), lambda p, i: (0, 0)),
            pl.BlockSpec((1, Do), lambda p, i: (0, 0)),
        ],
        out_specs=pl.BlockSpec((tn, Do), lambda p, i: (i, 0)),
        scratch_shapes=[pltpu.VMEM((2, Do), f32)],    # BN running [sum; sumsq]
        compiler_params=cp(("arbitrary", "arbitrary")),
    )(proj, agg, h_p, params["gamma_h"], params["beta_h"])

    # ---- 4) edge finalize: BN(e_new) + ReLU + residual ----
    kernel_d = functools.partial(_edge_final_kernel, e_true=E, residual=residual)
    e_out = pl.pallas_call(
        kernel_d,
        out_shape=jax.ShapeDtypeStruct((Ep, Do), f32),
        grid=(n_edge_tiles,),
        in_specs=[
            pl.BlockSpec((te, Do), lambda t: (t, 0)),
            pl.BlockSpec((te, Din), lambda t: (t, 0)),
            pl.BlockSpec((2, Do), lambda t: (0, 0)),
            pl.BlockSpec((1, Do), lambda t: (0, 0)),
            pl.BlockSpec((1, Do), lambda t: (0, 0)),
        ],
        out_specs=pl.BlockSpec((te, Do), lambda t: (t, 0)),
        compiler_params=cp(("parallel",)),
    )(e_new, e_p, e_stats, params["gamma_e"], params["beta_e"])

    return h_out[:N], e_out[:E]


# ---------------------------------------------------------------------------
# Pure-JAX reference of the torch forward (training mode, dropout=0)
# ---------------------------------------------------------------------------
def ref_forward(h, e, src, dst, params):
    lin = lambda x, w, b: x @ w + b
    Ah = lin(h, params["wa"], params["ba"])
    Bh = lin(h, params["wb"], params["bb"])
    Dh = lin(h, params["wd"], params["bd"])
    Eh = lin(h, params["we"], params["be"])
    Ce = lin(e, params["wc"], params["bc"])
    e_new = Dh[src] + Eh[dst] + Ce
    sigma = jax.nn.sigmoid(e_new)
    N = h.shape[0]
    sum_sigma_h = jax.ops.segment_sum(Bh[src] * sigma, dst, num_segments=N)
    sum_sigma = jax.ops.segment_sum(sigma, dst, num_segments=N)
    h_new = Ah + sum_sigma_h / (sum_sigma + 1e-6)

    def bn(x, g, b):
        m = jnp.mean(x, axis=0, keepdims=True)
        v = jnp.mean((x - m) ** 2, axis=0, keepdims=True)
        return (x - m) / jnp.sqrt(v + 1e-5) * g + b

    h_out = h + jnp.maximum(bn(h_new, params["gamma_h"], params["beta_h"]), 0.0)
    e_out = e + jnp.maximum(bn(e_new, params["gamma_e"], params["beta_e"]), 0.0)
    return h_out, e_out


def init_params(key, din, dout):
    ks = jax.random.split(key, 10)
    s = 1.0 / np.sqrt(din)
    mk_w = lambda k: jax.random.uniform(k, (din, dout), jnp.float32, -s, s)
    mk_b = lambda k: jax.random.uniform(k, (1, dout), jnp.float32, -s, s)
    return dict(
        wa=mk_w(ks[0]), ba=mk_b(ks[1]),
        wb=mk_w(ks[2]), bb=mk_b(ks[3]),
        wc=mk_w(ks[4]), bc=mk_b(ks[5]),
        wd=mk_w(ks[6]), bd=mk_b(ks[7]),
        we=mk_w(ks[8]), be=mk_b(ks[9]),
        gamma_h=jnp.ones((1, dout), jnp.float32),
        beta_h=jnp.zeros((1, dout), jnp.float32),
        gamma_e=jnp.ones((1, dout), jnp.float32),
        beta_e=jnp.zeros((1, dout), jnp.float32),
    )


if __name__ == "__main__":
    key = jax.random.PRNGKey(0)
    N, E, D = 16, 32, 32  # nodes, edges, hidden (input_dim == output_dim -> residual on)

    k_h, k_e, k_s, k_d, k_p = jax.random.split(key, 5)
    h = jax.random.normal(k_h, (N, D), jnp.float32)
    e = jax.random.normal(k_e, (E, D), jnp.float32)
    src = jax.random.randint(k_s, (E,), 0, N, jnp.int32)
    dst = jax.random.randint(k_d, (E,), 0, N, jnp.int32)
    params = init_params(k_p, D, D)

    fwd = jax.jit(functools.partial(res_gated_graph_conv, node_tile=8, edge_tile=16))
    h_out, e_out = jax.block_until_ready(fwd(h, e, src, dst, params))

    h_ref, e_ref = ref_forward(h, e, src, dst, params)
    np.testing.assert_allclose(np.asarray(h_out), np.asarray(h_ref), rtol=1e-4, atol=1e-4)
    np.testing.assert_allclose(np.asarray(e_out), np.asarray(e_ref), rtol=1e-4, atol=1e-4)

    print("KERNEL_OK")
</pallas_src>

<mosaic_0001>
module attributes {stable_mosaic.version = 11 : i64} {
  func.func @_node_proj_kernel(%arg0: i32, %arg1: memref<8x32xf32, #tpu.memory_space<vmem>>, %arg2: memref<32x128xf32, #tpu.memory_space<vmem>>, %arg3: memref<1x128xf32, #tpu.memory_space<vmem>>, %arg4: memref<8x128xf32, #tpu.memory_space<vmem>>) attributes {dimension_semantics = [#tpu.dimension_semantics<parallel>], iteration_bounds = array<i64: 2>, scalar_prefetch = 0 : i64, scratch_operands = 0 : i64, tpu.core_type = #tpu.core_type<tc>, window_params = [{transform_indices = @transform_0, window_bounds = array<i64: 8, 32>}, {pipeline_mode = #tpu.pipeline_mode<synchronous>, transform_indices = @transform_1, window_bounds = array<i64: 32, 128>}, {pipeline_mode = #tpu.pipeline_mode<synchronous>, transform_indices = @transform_2, window_bounds = array<i64: 1, 128>}, {transform_indices = @transform_3, window_bounds = array<i64: 8, 128>}]} {
    %c0 = arith.constant 0 : index
    %c0_0 = arith.constant 0 : index
    %0 = vector.load %arg1[%c0, %c0_0] : memref<8x32xf32, #tpu.memory_space<vmem>>, vector<8x32xf32>
    %c0_1 = arith.constant 0 : index
    %c0_2 = arith.constant 0 : index
    %1 = vector.load %arg2[%c0_1, %c0_2] : memref<32x128xf32, #tpu.memory_space<vmem>>, vector<32x128xf32>
    %cst = arith.constant dense<0.000000e+00> : vector<8x128xf32>
    %2 = tpu.matmul %0, %1, %cst {dimension_numbers = #tpu.dot_dimension_numbers<[1], [0], [0], [1], [0, 0, 1, 1], [], []>} : vector<8x32xf32>, vector<32x128xf32>, vector<8x128xf32> -> vector<8x128xf32>
    %c0_3 = arith.constant 0 : index
    %c0_4 = arith.constant 0 : index
    %3 = vector.load %arg3[%c0_3, %c0_4] : memref<1x128xf32, #tpu.memory_space<vmem>>, vector<1x128xf32>
    %4 = vector.broadcast %3 : vector<1x128xf32> to vector<8x128xf32>
    %5 = arith.addf %2, %4 : vector<8x128xf32>
    %c0_5 = arith.constant 0 : index
    %c0_6 = arith.constant 0 : index
    %6 = vector.load %arg4[%c0_5, %c0_6] : memref<8x128xf32, #tpu.memory_space<vmem>>, vector<8x128xf32>
    tpu.vector_store %arg4[%c0_5, %c0_6], %5 {strides = array<i32>} : memref<8x128xf32, #tpu.memory_space<vmem>>, vector<8x128xf32>,
    return
  }
  func.func @transform_0(%arg0: i32) -> (i32, i32) {
    %c0_i32 = arith.constant 0 : i32
    %c0_i32_0 = arith.constant 0 : i32
    return %arg0, %c0_i32 : i32, i32
  }
  func.func @transform_1(%arg0: i32) -> (i32, i32) {
    %c0_i32 = arith.constant 0 : i32
    %c0_i32_0 = arith.constant 0 : i32
    %c0_i32_1 = arith.constant 0 : i32
    return %c0_i32, %c0_i32_0 : i32, i32
  }
  func.func @transform_2(%arg0: i32) -> (i32, i32) {
    %c0_i32 = arith.constant 0 : i32
    %c0_i32_0 = arith.constant 0 : i32
    %c0_i32_1 = arith.constant 0 : i32
    return %c0_i32, %c0_i32_0 : i32, i32
  }
  func.func @transform_3(%arg0: i32) -> (i32, i32) {
    %c0_i32 = arith.constant 0 : i32
    %c0_i32_0 = arith.constant 0 : i32
    return %arg0, %c0_i32 : i32, i32
  }
}

module attributes {stable_mosaic.version = 11 : i64} {
  func.func @_edge_kernel(%arg0: i32, %arg1: memref<32xi32, #tpu.memory_space<smem>>, %arg2: memref<32xi32, #tpu.memory_space<smem>>, %arg3: memref<16x32xf32, #tpu.memory_space<vmem>>, %arg4: memref<16x128xf32, #tpu.memory_space<vmem>>, %arg5: memref<32x32xf32, #tpu.memory_space<vmem>>, %arg6: memref<1x32xf32, #tpu.memory_space<vmem>>, %arg7: memref<16x32xf32, #tpu.memory_space<vmem>>, %arg8: memref<16x64xf32, #tpu.memory_space<vmem>>, %arg9: memref<2x32xf32, #tpu.memory_space<vmem>>, %arg10: memref<16x128xf32, #tpu.memory_space<vmem>>, %arg11: memref<16x128xf32, #tpu.memory_space<vmem>>, %arg12: memref<16x64xf32, #tpu.memory_space<vmem>>) attributes {dimension_semantics = [#tpu.dimension_semantics<arbitrary>], iteration_bounds = array<i64: 2>, scalar_prefetch = 2 : i64, scratch_operands = 3 : i64, tpu.core_type = #tpu.core_type<tc>, window_params = [{transform_indices = @transform_0, window_bounds = array<i64: 16, 32>}, {pipeline_mode = #tpu.pipeline_mode<synchronous>, transform_indices = @transform_1, window_bounds = array<i64: 16, 128>}, {pipeline_mode = #tpu.pipeline_mode<synchronous>, transform_indices = @transform_2, window_bounds = array<i64: 32, 32>}, {pipeline_mode = #tpu.pipeline_mode<synchronous>, transform_indices = @transform_3, window_bounds = array<i64: 1, 32>}, {transform_indices = @transform_4, window_bounds = array<i64: 16, 32>}, {pipeline_mode = #tpu.pipeline_mode<synchronous>, transform_indices = @transform_5, window_bounds = array<i64: 16, 64>}, {pipeline_mode = #tpu.pipeline_mode<synchronous>, transform_indices = @transform_6, window_bounds = array<i64: 2, 32>}]} {
    %c16_i32 = arith.constant 16 : i32
    %0 = arith.muli %arg0, %c16_i32 : i32
    %c0_i32 = arith.constant 0 : i32
    %1 = arith.cmpi eq, %arg0, %c0_i32 : i32
    %2 = arith.extui %1 : i1 to i32
    %c0_i32_0 = arith.constant 0 : i32
    %3 = arith.cmpi ne, %2, %c0_i32_0 : i32
    scf.if %3 {
      %cst_32 = arith.constant 0.000000e+00 : f32
      %48 = vector.broadcast %cst_32 : f32 to vector<16x64xf32>
      %c0_33 = arith.constant 0 : index
      %c0_34 = arith.constant 0 : index
      %49 = vector.load %arg8[%c0_33, %c0_34] : memref<16x64xf32, #tpu.memory_space<vmem>>, vector<16x64xf32>
      tpu.vector_store %arg8[%c0_33, %c0_34], %48 {strides = array<i32>} : memref<16x64xf32, #tpu.memory_space<vmem>>, vector<16x64xf32>,
      %cst_35 = arith.constant 0.000000e+00 : f32
      %50 = vector.broadcast %cst_35 : f32 to vector<2x32xf32>
      %c0_36 = arith.constant 0 : index
      %c0_37 = arith.constant 0 : index
      %51 = vector.load %arg9[%c0_36, %c0_37] : memref<2x32xf32, #tpu.memory_space<vmem>>, vector<2x32xf32>
      tpu.vector_store %arg9[%c0_36, %c0_37], %50 {strides = array<i32>} : memref<2x32xf32, #tpu.memory_space<vmem>>, vector<2x32xf32>,
    } else {
    }
    %c0_i32_1 = arith.constant 0 : i32
    %c16_i32_2 = arith.constant 16 : i32
    %4 = arith.addi %c0_i32_1, %c16_i32_2 : i32
    %c1_i32 = arith.constant 1 : i32
    scf.for %arg13 = %c0_i32_1 to %4 step %c1_i32  : i32 {
      %48 = arith.addi %0, %arg13 : i32
      %49 = arith.index_cast %48 : i32 to index
      %50 = memref.load %arg1[%49] : memref<32xi32, #tpu.memory_space<smem>>
      %51 = arith.addi %0, %arg13 : i32
      %52 = arith.index_cast %51 : i32 to index
      %53 = memref.load %arg2[%52] : memref<32xi32, #tpu.memory_space<smem>>
      %54 = arith.index_cast %50 : i32 to index
      %c0_32 = arith.constant 0 : index
      %55 = vector.load %arg4[%54, %c0_32] : memref<16x128xf32, #tpu.memory_space<vmem>>, vector<1x128xf32>
      %56 = arith.index_cast %arg13 : i32 to index
      %c0_33 = arith.constant 0 : index
      %57 = vector.load %arg10[%56, %c0_33] : memref<16x128xf32, #tpu.memory_space<vmem>>, vector<1x128xf32>
      tpu.vector_store %arg10[%56, %c0_33], %55 {strides = array<i32>} : memref<16x128xf32, #tpu.memory_space<vmem>>, vector<1x128xf32>,
      %58 = arith.index_cast %53 : i32 to index
      %c0_34 = arith.constant 0 : index
      %59 = vector.load %arg4[%58, %c0_34] : memref<16x128xf32, #tpu.memory_space<vmem>>, vector<1x128xf32>
      %60 = arith.index_cast %arg13 : i32 to index
      %c0_35 = arith.constant 0 : index
      %61 = vector.load %arg11[%60, %c0_35] : memref<16x128xf32, #tpu.memory_space<vmem>>, vector<1x128xf32>
      tpu.vector_store %arg11[%60, %c0_35], %59 {strides = array<i32>} : memref<16x128xf32, #tpu.memory_space<vmem>>, vector<1x128xf32>,
    }
    %c16_i32_3 = arith.constant 16 : i32
    %c0 = arith.constant 0 : index
    %c0_4 = arith.constant 0 : index
    %5 = vector.load %arg3[%c0, %c0_4] : memref<16x32xf32, #tpu.memory_space<vmem>>, vector<16x32xf32>
    %c0_5 = arith.constant 0 : index
    %c0_6 = arith.constant 0 : index
    %6 = vector.load %arg5[%c0_5, %c0_6] : memref<32x32xf32, #tpu.memory_space<vmem>>, vector<32x32xf32>
    %cst = arith.constant dense<0.000000e+00> : vector<16x32xf32>
    %7 = tpu.matmul %5, %6, %cst {dimension_numbers = #tpu.dot_dimension_numbers<[1], [0], [0], [1], [0, 0, 1, 1], [], []>} : vector<16x32xf32>, vector<32x32xf32>, vector<16x32xf32> -> vector<16x32xf32>
    %c0_7 = arith.constant 0 : index
    %c0_8 = arith.constant 0 : index
    %8 = vector.load %arg6[%c0_7, %c0_8] : memref<1x32xf32, #tpu.memory_space<vmem>>, vector<1x32xf32>
    %9 = vector.broadcast %8 : vector<1x32xf32> to vector<16x32xf32>
    %10 = arith.addf %7, %9 : vector<16x32xf32>
    %c0_9 = arith.constant 0 : index
    %c0_10 = arith.constant 0 : index
    %11 = vector.load %arg10[%c0_9, %c0_10] : memref<16x128xf32, #tpu.memory_space<vmem>>, vector<16x128xf32>
    %c0_11 = arith.constant 0 : index
    %c0_12 = arith.constant 0 : index
    %12 = vector.load %arg11[%c0_11, %c0_12] : memref<16x128xf32, #tpu.memory_space<vmem>>, vector<16x128xf32>
    %13 = vector.extract_strided_slice %11 {offsets = [0, 32], sizes = [16, 32], strides = [1, 1]} : vector<16x128xf32> to vector<16x32xf32>
    %14 = vector.extract_strided_slice %11 {offsets = [0, 64], sizes = [16, 32], strides = [1, 1]} : vector<16x128xf32> to vector<16x32xf32>
    %15 = vector.extract_strided_slice %12 {offsets = [0, 96], sizes = [16, 32], strides = [1, 1]} : vector<16x128xf32> to vector<16x32xf32>
    %16 = arith.addf %14, %15 : vector<16x32xf32>
    %17 = arith.addf %16, %10 : vector<16x32xf32>
    %18 = arith.negf %17 : vector<16x32xf32>
    %19 = math.exp %18 : vector<16x32xf32>
    %cst_13 = arith.constant 1.000000e+00 : f32
    %20 = vector.broadcast %cst_13 : f32 to vector<16x32xf32>
    %21 = arith.addf %20, %19 : vector<16x32xf32>
    %22 = arith.divf %20, %21 : vector<16x32xf32>
    %23 = arith.mulf %13, %22 : vector<16x32xf32>
    %c0_14 = arith.constant 0 : index
    %c0_15 = arith.constant 0 : index
    %24 = vector.load %arg7[%c0_14, %c0_15] : memref<16x32xf32, #tpu.memory_space<vmem>>, vector<16x32xf32>
    tpu.vector_store %arg7[%c0_14, %c0_15], %17 {strides = array<i32>} : memref<16x32xf32, #tpu.memory_space<vmem>>, vector<16x32xf32>,
    %25 = tpu.iota {dimensions = array<i32: 0>} : vector<16x1xi32>
    %26 = vector.broadcast %0 : i32 to vector<16x1xi32>
    %27 = arith.addi %26, %25 : vector<16x1xi32>
    %c32_i32 = arith.constant 32 : i32
    %28 = vector.broadcast %c32_i32 : i32 to vector<16x1xi32>
    %29 = arith.cmpi slt, %27, %28 : vector<16x1xi32>
    %30 = arith.extui %29 : vector<16x1xi1> to vector<16x1xi32>
    %31 = arith.sitofp %30 : vector<16x1xi32> to vector<16x1xf32>
    %32 = vector.broadcast %31 : vector<16x1xf32> to vector<16x32xf32>
    %33 = arith.mulf %17, %32 : vector<16x32xf32>
    %c0_16 = arith.constant 0 : index
    %c0_17 = arith.constant 0 : index
    %34 = vector.load %arg9[%c0_16, %c0_17] : memref<2x32xf32, #tpu.memory_space<vmem>>, vector<1x32xf32>
    %cst_18 = arith.constant dense<0.000000e+00> : vector<32xf32>
    %35 = vector.multi_reduction <add>, %33, %cst_18 [0] : vector<16x32xf32> to vector<32xf32>
    %36 = vector.shape_cast %35 : vector<32xf32> to vector<1x32xf32>
    %37 = arith.addf %34, %36 : vector<1x32xf32>
    %c0_19 = arith.constant 0 : index
    %c0_20 = arith.constant 0 : index
    %38 = vector.load %arg9[%c0_19, %c0_20] : memref<2x32xf32, #tpu.memory_space<vmem>>, vector<1x32xf32>
    tpu.vector_store %arg9[%c0_19, %c0_20], %37 {strides = array<i32>} : memref<2x32xf32, #tpu.memory_space<vmem>>, vector<1x32xf32>,
    %c1 = arith.constant 1 : index
    %c0_21 = arith.constant 0 : index
    %39 = vector.load %arg9[%c1, %c0_21] : memref<2x32xf32, #tpu.memory_space<vmem>>, vector<1x32xf32>
    %40 = arith.mulf %33, %17 : vector<16x32xf32>
    %cst_22 = arith.constant dense<0.000000e+00> : vector<32xf32>
    %41 = vector.multi_reduction <add>, %40, %cst_22 [0] : vector<16x32xf32> to vector<32xf32>
    %42 = vector.shape_cast %41 : vector<32xf32> to vector<1x32xf32>
    %43 = arith.addf %39, %42 : vector<1x32xf32>
    %c1_23 = arith.constant 1 : index
    %c0_24 = arith.constant 0 : index
    %44 = vector.load %arg9[%c1_23, %c0_24] : memref<2x32xf32, #tpu.memory_space<vmem>>, vector<1x32xf32>
    tpu.vector_store %arg9[%c1_23, %c0_24], %43 {strides = array<i32>} : memref<2x32xf32, #tpu.memory_space<vmem>>, vector<1x32xf32>,
    %c0_25 = arith.constant 0 : index
    %c0_26 = arith.constant 0 : index
    %45 = vector.load %arg12[%c0_25, %c0_26] : memref<16x64xf32, #tpu.memory_space<vmem>>, vector<16x32xf32>
    tpu.vector_store %arg12[%c0_25, %c0_26], %23 {strides = array<i32>} : memref<16x64xf32, #tpu.memory_space<vmem>>, vector<16x32xf32>,
    %c0_27 = arith.constant 0 : index
    %c32 = arith.constant 32 : index
    %46 = vector.load %arg12[%c0_27, %c32] : memref<16x64xf32, #tpu.memory_space<vmem>>, vector<16x32xf32>
    tpu.vector_store %arg12[%c0_27, %c32], %22 {strides = array<i32>} : memref<16x64xf32, #tpu.memory_space<vmem>>, vector<16x32xf32>,
    %c0_i32_28 = arith.constant 0 : i32
    %c16_i32_29 = arith.constant 16 : i32
    %47 = arith.addi %c0_i32_28, %c16_i32_29 : i32
    %c1_i32_30 = arith.constant 1 : i32
    scf.for %arg13 = %c0_i32_28 to %47 step %c1_i32_30  : i32 {
      %48 = arith.addi %0, %arg13 : i32
      %c32_i32_32 = arith.constant 32 : i32
      %49 = arith.cmpi slt, %48, %c32_i32_32 : i32
      %50 = arith.extui %49 : i1 to i32
      %c0_i32_33 = arith.constant 0 : i32
      %51 = arith.cmpi ne, %50, %c0_i32_33 : i32
      scf.if %51 {
        %52 = arith.addi %0, %arg13 : i32
        %53 = arith.index_cast %52 : i32 to index
        %54 = memref.load %arg2[%53] : memref<32xi32, #tpu.memory_space<smem>>
        %55 = arith.index_cast %54 : i32 to index
        %c0_34 = arith.constant 0 : index
        %56 = vector.load %arg8[%55, %c0_34] : memref<16x64xf32, #tpu.memory_space<vmem>>, vector<1x64xf32>
        %57 = arith.index_cast %arg13 : i32 to index
        %c0_35 = arith.constant 0 : index
        %58 = vector.load %arg12[%57, %c0_35] : memref<16x64xf32, #tpu.memory_space<vmem>>, vector<1x64xf32>
        %59 = arith.addf %56, %58 : vector<1x64xf32>
        %60 = arith.index_cast %54 : i32 to index
        %c0_36 = arith.constant 0 : index
        %61 = vector.load %arg8[%60, %c0_36] : memref<16x64xf32, #tpu.memory_space<vmem>>, vector<1x64xf32>
        tpu.vector_store %arg8[%60, %c0_36], %59 {strides = array<i32>} : memref<16x64xf32, #tpu.memory_space<vmem>>, vector<1x64xf32>,
      } else {
      }
    }
    %c16_i32_31 = arith.constant 16 : i32
    return
  }
  func.func @transform_0(%arg0: i32, %arg1: memref<32xi32, #tpu.memory_space<smem>>, %arg2: memref<32xi32, #tpu.memory_space<smem>>) -> (i32, i32) {
    %c0_i32 = arith.constant 0 : i32
    %c0_i32_0 = arith.constant 0 : i32
    return %arg0, %c0_i32 : i32, i32
  }
  func.func @transform_1(%arg0: i32, %arg1: memref<32xi32, #tpu.memory_space<smem>>, %arg2: memref<32xi32, #tpu.memory_space<smem>>) -> (i32, i32) {
    %c0_i32 = arith.constant 0 : i32
    %c0_i32_0 = arith.constant 0 : i32
    %c0_i32_1 = arith.constant 0 : i32
    return %c0_i32, %c0_i32_0 : i32, i32
  }
  func.func @transform_2(%arg0: i32, %arg1: memref<32xi32, #tpu.memory_space<smem>>, %arg2: memref<32xi32, #tpu.memory_space<smem>>) -> (i32, i32) {
    %c0_i32 = arith.constant 0 : i32
    %c0_i32_0 = arith.constant 0 : i32
    %c0_i32_1 = arith.constant 0 : i32
    return %c0_i32, %c0_i32_0 : i32, i32
  }
  func.func @transform_3(%arg0: i32, %arg1: memref<32xi32, #tpu.memory_space<smem>>, %arg2: memref<32xi32, #tpu.memory_space<smem>>) -> (i32, i32) {
    %c0_i32 = arith.constant 0 : i32
    %c0_i32_0 = arith.constant 0 : i32
    %c0_i32_1 = arith.constant 0 : i32
    return %c0_i32, %c0_i32_0 : i32, i32
  }
  func.func @transform_4(%arg0: i32, %arg1: memref<32xi32, #tpu.memory_space<smem>>, %arg2: memref<32xi32, #tpu.memory_space<smem>>) -> (i32, i32) {
    %c0_i32 = arith.constant 0 : i32
    %c0_i32_0 = arith.constant 0 : i32
    return %arg0, %c0_i32 : i32, i32
  }
  func.func @transform_5(%arg0: i32, %arg1: memref<32xi32, #tpu.memory_space<smem>>, %arg2: memref<32xi32, #tpu.memory_space<smem>>) -> (i32, i32) {
    %c0_i32 = arith.constant 0 : i32
    %c0_i32_0 = arith.constant 0 : i32
    %c0_i32_1 = arith.constant 0 : i32
    return %c0_i32, %c0_i32_0 : i32, i32
  }
  func.func @transform_6(%arg0: i32, %arg1: memref<32xi32, #tpu.memory_space<smem>>, %arg2: memref<32xi32, #tpu.memory_space<smem>>) -> (i32, i32) {
    %c0_i32 = arith.constant 0 : i32
    %c0_i32_0 = arith.constant 0 : i32
    %c0_i32_1 = arith.constant 0 : i32
    return %c0_i32, %c0_i32_0 : i32, i32
  }
}

module attributes {stable_mosaic.version = 11 : i64} {
  func.func @_edge_final_kernel(%arg0: i32, %arg1: memref<16x32xf32, #tpu.memory_space<vmem>>, %arg2: memref<16x32xf32, #tpu.memory_space<vmem>>, %arg3: memref<2x32xf32, #tpu.memory_space<vmem>>, %arg4: memref<1x32xf32, #tpu.memory_space<vmem>>, %arg5: memref<1x32xf32, #tpu.memory_space<vmem>>, %arg6: memref<16x32xf32, #tpu.memory_space<vmem>>) attributes {dimension_semantics = [#tpu.dimension_semantics<parallel>], iteration_bounds = array<i64: 2>, scalar_prefetch = 0 : i64, scratch_operands = 0 : i64, tpu.core_type = #tpu.core_type<tc>, window_params = [{transform_indices = @transform_0, window_bounds = array<i64: 16, 32>}, {transform_indices = @transform_1, window_bounds = array<i64: 16, 32>}, {pipeline_mode = #tpu.pipeline_mode<synchronous>, transform_indices = @transform_2, window_bounds = array<i64: 2, 32>}, {pipeline_mode = #tpu.pipeline_mode<synchronous>, transform_indices = @transform_3, window_bounds = array<i64: 1, 32>}, {pipeline_mode = #tpu.pipeline_mode<synchronous>, transform_indices = @transform_4, window_bounds = array<i64: 1, 32>}, {transform_indices = @transform_5, window_bounds = array<i64: 16, 32>}]} {
    %c0 = arith.constant 0 : index
    %c0_0 = arith.constant 0 : index
    %0 = vector.load %arg3[%c0, %c0_0] : memref<2x32xf32, #tpu.memory_space<vmem>>, vector<1x32xf32>
    %cst = arith.constant 3.125000e-02 : f32
    %1 = vector.broadcast %cst : f32 to vector<1x32xf32>
    %2 = arith.mulf %0, %1 : vector<1x32xf32>
    %c1 = arith.constant 1 : index
    %c0_1 = arith.constant 0 : index
    %3 = vector.load %arg3[%c1, %c0_1] : memref<2x32xf32, #tpu.memory_space<vmem>>, vector<1x32xf32>
    %cst_2 = arith.constant 3.125000e-02 : f32
    %4 = vector.broadcast %cst_2 : f32 to vector<1x32xf32>
    %5 = arith.mulf %3, %4 : vector<1x32xf32>
    %6 = arith.mulf %2, %2 : vector<1x32xf32>
    %7 = arith.subf %5, %6 : vector<1x32xf32>
    %c0_3 = arith.constant 0 : index
    %c0_4 = arith.constant 0 : index
    %8 = vector.load %arg1[%c0_3, %c0_4] : memref<16x32xf32, #tpu.memory_space<vmem>>, vector<16x32xf32>
    %9 = vector.broadcast %2 : vector<1x32xf32> to vector<16x32xf32>
    %10 = arith.subf %8, %9 : vector<16x32xf32>
    %cst_5 = arith.constant 9.99999974E-6 : f32
    %11 = vector.broadcast %cst_5 : f32 to vector<1x32xf32>
    %12 = arith.addf %7, %11 : vector<1x32xf32>
    %13 = math.rsqrt %12 : vector<1x32xf32>
    %14 = vector.broadcast %13 : vector<1x32xf32> to vector<16x32xf32>
    %15 = arith.mulf %10, %14 : vector<16x32xf32>
    %c0_6 = arith.constant 0 : index
    %c0_7 = arith.constant 0 : index
    %16 = vector.load %arg4[%c0_6, %c0_7] : memref<1x32xf32, #tpu.memory_space<vmem>>, vector<1x32xf32>
    %17 = vector.broadcast %16 : vector<1x32xf32> to vector<16x32xf32>
    %18 = arith.mulf %15, %17 : vector<16x32xf32>
    %c0_8 = arith.constant 0 : index
    %c0_9 = arith.constant 0 : index
    %19 = vector.load %arg5[%c0_8, %c0_9] : memref<1x32xf32, #tpu.memory_space<vmem>>, vector<1x32xf32>
    %20 = vector.broadcast %19 : vector<1x32xf32> to vector<16x32xf32>
    %21 = arith.addf %18, %20 : vector<16x32xf32>
    %cst_10 = arith.constant 0.000000e+00 : f32
    %22 = vector.broadcast %cst_10 : f32 to vector<16x32xf32>
    %23 = arith.maximumf %21, %22 : vector<16x32xf32>
    %c0_11 = arith.constant 0 : index
    %c0_12 = arith.constant 0 : index
    %24 = vector.load %arg2[%c0_11, %c0_12] : memref<16x32xf32, #tpu.memory_space<vmem>>, vector<16x32xf32>
    %25 = arith.addf %24, %23 : vector<16x32xf32>
    %c0_13 = arith.constant 0 : index
    %c0_14 = arith.constant 0 : index
    %26 = vector.load %arg6[%c0_13, %c0_14] : memref<16x32xf32, #tpu.memory_space<vmem>>, vector<16x32xf32>
    tpu.vector_store %arg6[%c0_13, %c0_14], %25 {strides = array<i32>} : memref<16x32xf32, #tpu.memory_space<vmem>>, vector<16x32xf32>,
    return
  }
  func.func @transform_0(%arg0: i32) -> (i32, i32) {
    %c0_i32 = arith.constant 0 : i32
    %c0_i32_0 = arith.constant 0 : i32
    return %arg0, %c0_i32 : i32, i32
  }
  func.func @transform_1(%arg0: i32) -> (i32, i32) {
    %c0_i32 = arith.constant 0 : i32
    %c0_i32_0 = arith.constant 0 : i32
    return %arg0, %c0_i32 : i32, i32
  }
  func.func @transform_2(%arg0: i32) -> (i32, i32) {
    %c0_i32 = arith.constant 0 : i32
    %c0_i32_0 = arith.constant 0 : i32
    %c0_i32_1 = arith.constant 0 : i32
    return %c0_i32, %c0_i32_0 : i32, i32
  }
  func.func @transform_3(%arg0: i32) -> (i32, i32) {
    %c0_i32 = arith.constant 0 : i32
    %c0_i32_0 = arith.constant 0 : i32
    %c0_i32_1 = arith.constant 0 : i32
    return %c0_i32, %c0_i32_0 : i32, i32
  }
  func.func @transform_4(%arg0: i32) -> (i32, i32) {
    %c0_i32 = arith.constant 0 : i32
    %c0_i32_0 = arith.constant 0 : i32
    %c0_i32_1 = arith.constant 0 : i32
    return %c0_i32, %c0_i32_0 : i32, i32
  }
  func.func @transform_5(%arg0: i32) -> (i32, i32) {
    %c0_i32 = arith.constant 0 : i32
    %c0_i32_0 = arith.constant 0 : i32
    return %arg0, %c0_i32 : i32, i32
  }
}

module attributes {stable_mosaic.version = 11 : i64} {
  func.func @_node_final_kernel(%arg0: i32, %arg1: i32, %arg2: memref<8x128xf32, #tpu.memory_space<vmem>>, %arg3: memref<8x64xf32, #tpu.memory_space<vmem>>, %arg4: memref<8x32xf32, #tpu.memory_space<vmem>>, %arg5: memref<1x32xf32, #tpu.memory_space<vmem>>, %arg6: memref<1x32xf32, #tpu.memory_space<vmem>>, %arg7: memref<8x32xf32, #tpu.memory_space<vmem>>, %arg8: memref<2x32xf32, #tpu.memory_space<vmem>>) attributes {dimension_semantics = [#tpu.dimension_semantics<arbitrary>, #tpu.dimension_semantics<arbitrary>], iteration_bounds = array<i64: 2, 2>, scalar_prefetch = 0 : i64, scratch_operands = 1 : i64, tpu.core_type = #tpu.core_type<tc>, window_params = [{transform_indices = @transform_0, window_bounds = array<i64: 8, 128>}, {transform_indices = @transform_1, window_bounds = array<i64: 8, 64>}, {transform_indices = @transform_2, window_bounds = array<i64: 8, 32>}, {pipeline_mode = #tpu.pipeline_mode<synchronous>, transform_indices = @transform_3, window_bounds = array<i64: 1, 32>}, {pipeline_mode = #tpu.pipeline_mode<synchronous>, transform_indices = @transform_4, window_bounds = array<i64: 1, 32>}, {transform_indices = @transform_5, window_bounds = array<i64: 8, 32>}]} {
    %c0 = arith.constant 0 : index
    %c0_0 = arith.constant 0 : index
    %0 = vector.load %arg2[%c0, %c0_0] : memref<8x128xf32, #tpu.memory_space<vmem>>, vector<8x32xf32>
    %c0_1 = arith.constant 0 : index
    %c0_2 = arith.constant 0 : index
    %1 = vector.load %arg3[%c0_1, %c0_2] : memref<8x64xf32, #tpu.memory_space<vmem>>, vector<8x32xf32>
    %c0_3 = arith.constant 0 : index
    %c32 = arith.constant 32 : index
    %2 = vector.load %arg3[%c0_3, %c32] : memref<8x64xf32, #tpu.memory_space<vmem>>, vector<8x32xf32>
    %cst = arith.constant 9.99999997E-7 : f32
    %3 = vector.broadcast %cst : f32 to vector<8x32xf32>
    %4 = arith.addf %2, %3 : vector<8x32xf32>
    %5 = arith.divf %1, %4 : vector<8x32xf32>
    %6 = arith.addf %0, %5 : vector<8x32xf32>
    %c0_i32 = arith.constant 0 : i32
    %7 = arith.cmpi eq, %arg0, %c0_i32 : i32
    %8 = arith.extui %7 : i1 to i32
    %c0_i32_4 = arith.constant 0 : i32
    %9 = arith.cmpi ne, %8, %c0_i32_4 : i32
    scf.if %9 {
      %c0_i32_6 = arith.constant 0 : i32
      %13 = arith.cmpi eq, %arg1, %c0_i32_6 : i32
      %14 = arith.extui %13 : i1 to i32
      %c0_i32_7 = arith.constant 0 : i32
      %15 = arith.cmpi ne, %14, %c0_i32_7 : i32
      scf.if %15 {
        %cst_19 = arith.constant 0.000000e+00 : f32
        %38 = vector.broadcast %cst_19 : f32 to vector<2x32xf32>
        %c0_20 = arith.constant 0 : index
        %c0_21 = arith.constant 0 : index
        %39 = vector.load %arg8[%c0_20, %c0_21] : memref<2x32xf32, #tpu.memory_space<vmem>>, vector<2x32xf32>
        tpu.vector_store %arg8[%c0_20, %c0_21], %38 {strides = array<i32>} : memref<2x32xf32, #tpu.memory_space<vmem>>, vector<2x32xf32>,
      } else {
      }
      %c8_i32 = arith.constant 8 : i32
      %16 = arith.muli %arg1, %c8_i32 : i32
      %17 = tpu.iota {dimensions = array<i32: 0>} : vector<8x1xi32>
      %18 = vector.broadcast %16 : i32 to vector<8x1xi32>
      %19 = arith.addi %18, %17 : vector<8x1xi32>
      %c16_i32 = arith.constant 16 : i32
      %20 = vector.broadcast %c16_i32 : i32 to vector<8x1xi32>
      %21 = arith.cmpi slt, %19, %20 : vector<8x1xi32>
      %22 = arith.extui %21 : vector<8x1xi1> to vector<8x1xi32>
      %23 = arith.sitofp %22 : vector<8x1xi32> to vector<8x1xf32>
      %24 = vector.broadcast %23 : vector<8x1xf32> to vector<8x32xf32>
      %25 = arith.mulf %6, %24 : vector<8x32xf32>
      %c0_8 = arith.constant 0 : index
      %c0_9 = arith.constant 0 : index
      %26 = vector.load %arg8[%c0_8, %c0_9] : memref<2x32xf32, #tpu.memory_space<vmem>>, vector<1x32xf32>
      %cst_10 = arith.constant dense<0.000000e+00> : vector<32xf32>
      %27 = vector.multi_reduction <add>, %25, %cst_10 [0] : vector<8x32xf32> to vector<32xf32>
      %28 = vector.shape_cast %27 : vector<32xf32> to vector<1x32xf32>
      %29 = arith.addf %26, %28 : vector<1x32xf32>
      %c0_11 = arith.constant 0 : index
      %c0_12 = arith.constant 0 : index
      %30 = vector.load %arg8[%c0_11, %c0_12] : memref<2x32xf32, #tpu.memory_space<vmem>>, vector<1x32xf32>
      tpu.vector_store %arg8[%c0_11, %c0_12], %29 {strides = array<i32>} : memref<2x32xf32, #tpu.memory_space<vmem>>, vector<1x32xf32>,
      %c1 = arith.constant 1 : index
      %c0_13 = arith.constant 0 : index
      %31 = vector.load %arg8[%c1, %c0_13] : memref<2x32xf32, #tpu.memory_space<vmem>>, vector<1x32xf32>
      %32 = arith.mulf %25, %6 : vector<8x32xf32>
      %cst_14 = arith.constant dense<0.000000e+00> : vector<32xf32>
      %33 = vector.multi_reduction <add>, %32, %cst_14 [0] : vector<8x32xf32> to vector<32xf32>
      %34 = vector.shape_cast %33 : vector<32xf32> to vector<1x32xf32>
      %35 = arith.addf %31, %34 : vector<1x32xf32>
      %c1_15 = arith.constant 1 : index
      %c0_16 = arith.constant 0 : index
      %36 = vector.load %arg8[%c1_15, %c0_16] : memref<2x32xf32, #tpu.memory_space<vmem>>, vector<1x32xf32>
      tpu.vector_store %arg8[%c1_15, %c0_16], %35 {strides = array<i32>} : memref<2x32xf32, #tpu.memory_space<vmem>>, vector<1x32xf32>,
      %c0_17 = arith.constant 0 : index
      %c0_18 = arith.constant 0 : index
      %37 = vector.load %arg7[%c0_17, %c0_18] : memref<8x32xf32, #tpu.memory_space<vmem>>, vector<8x32xf32>
      tpu.vector_store %arg7[%c0_17, %c0_18], %6 {strides = array<i32>} : memref<8x32xf32, #tpu.memory_space<vmem>>, vector<8x32xf32>,
    } else {
    }
    %c1_i32 = arith.constant 1 : i32
    %10 = arith.cmpi eq, %arg0, %c1_i32 : i32
    %11 = arith.extui %10 : i1 to i32
    %c0_i32_5 = arith.constant 0 : i32
    %12 = arith.cmpi ne, %11, %c0_i32_5 : i32
    scf.if %12 {
      %c0_6 = arith.constant 0 : index
      %c0_7 = arith.constant 0 : index
      %13 = vector.load %arg8[%c0_6, %c0_7] : memref<2x32xf32, #tpu.memory_space<vmem>>, vector<1x32xf32>
      %cst_8 = arith.constant 6.250000e-02 : f32
      %14 = vector.broadcast %cst_8 : f32 to vector<1x32xf32>
      %15 = arith.mulf %13, %14 : vector<1x32xf32>
      %c1 = arith.constant 1 : index
      %c0_9 = arith.constant 0 : index
      %16 = vector.load %arg8[%c1, %c0_9] : memref<2x32xf32, #tpu.memory_space<vmem>>, vector<1x32xf32>
      %cst_10 = arith.constant 6.250000e-02 : f32
      %17 = vector.broadcast %cst_10 : f32 to vector<1x32xf32>
      %18 = arith.mulf %16, %17 : vector<1x32xf32>
      %19 = arith.mulf %15, %15 : vector<1x32xf32>
      %20 = arith.subf %18, %19 : vector<1x32xf32>
      %21 = vector.broadcast %15 : vector<1x32xf32> to vector<8x32xf32>
      %22 = arith.subf %6, %21 : vector<8x32xf32>
      %cst_11 = arith.constant 9.99999974E-6 : f32
      %23 = vector.broadcast %cst_11 : f32 to vector<1x32xf32>
      %24 = arith.addf %20, %23 : vector<1x32xf32>
      %25 = math.rsqrt %24 : vector<1x32xf32>
      %26 = vector.broadcast %25 : vector<1x32xf32> to vector<8x32xf32>
      %27 = arith.mulf %22, %26 : vector<8x32xf32>
      %c0_12 = arith.constant 0 : index
      %c0_13 = arith.constant 0 : index
      %28 = vector.load %arg5[%c0_12, %c0_13] : memref<1x32xf32, #tpu.memory_space<vmem>>, vector<1x32xf32>
      %29 = vector.broadcast %28 : vector<1x32xf32> to vector<8x32xf32>
      %30 = arith.mulf %27, %29 : vector<8x32xf32>
      %c0_14 = arith.constant 0 : index
      %c0_15 = arith.constant 0 : index
      %31 = vector.load %arg6[%c0_14, %c0_15] : memref<1x32xf32, #tpu.memory_space<vmem>>, vector<1x32xf32>
      %32 = vector.broadcast %31 : vector<1x32xf32> to vector<8x32xf32>
      %33 = arith.addf %30, %32 : vector<8x32xf32>
      %cst_16 = arith.constant 0.000000e+00 : f32
      %34 = vector.broadcast %cst_16 : f32 to vector<8x32xf32>
      %35 = arith.maximumf %33, %34 : vector<8x32xf32>
      %c0_17 = arith.constant 0 : index
      %c0_18 = arith.constant 0 : index
      %36 = vector.load %arg4[%c0_17, %c0_18] : memref<8x32xf32, #tpu.memory_space<vmem>>, vector<8x32xf32>
      %37 = arith.addf %36, %35 : vector<8x32xf32>
      %c0_19 = arith.constant 0 : index
      %c0_20 = arith.constant 0 : index
      %38 = vector.load %arg7[%c0_19, %c0_20] : memref<8x32xf32, #tpu.memory_space<vmem>>, vector<8x32xf32>
      tpu.vector_store %arg7[%c0_19, %c0_20], %37 {strides = array<i32>} : memref<8x32xf32, #tpu.memory_space<vmem>>, vector<8x32xf32>,
    } else {
    }
    return
  }
  func.func @transform_0(%arg0: i32, %arg1: i32) -> (i32, i32) {
    %c0_i32 = arith.constant 0 : i32
    %c0_i32_0 = arith.constant 0 : i32
    return %arg1, %c0_i32 : i32, i32
  }
  func.func @transform_1(%arg0: i32, %arg1: i32) -> (i32, i32) {
    %c0_i32 = arith.constant 0 : i32
    %c0_i32_0 = arith.constant 0 : i32
    return %arg1, %c0_i32 : i32, i32
  }
  func.func @transform_2(%arg0: i32, %arg1: i32) -> (i32, i32) {
    %c0_i32 = arith.constant 0 : i32
    %c0_i32_0 = arith.constant 0 : i32
    return %arg1, %c0_i32 : i32, i32
  }
  func.func @transform_3(%arg0: i32, %arg1: i32) -> (i32, i32) {
    %c0_i32 = arith.constant 0 : i32
    %c0_i32_0 = arith.constant 0 : i32
    %c0_i32_1 = arith.constant 0 : i32
    return %c0_i32, %c0_i32_0 : i32, i32
  }
  func.func @transform_4(%arg0: i32, %arg1: i32) -> (i32, i32) {
    %c0_i32 = arith.constant 0 : i32
    %c0_i32_0 = arith.constant 0 : i32
    %c0_i32_1 = arith.constant 0 : i32
    return %c0_i32, %c0_i32_0 : i32, i32
  }
  func.func @transform_5(%arg0: i32, %arg1: i32) -> (i32, i32) {
    %c0_i32 = arith.constant 0 : i32
    %c0_i32_0 = arith.constant 0 : i32
    return %arg1, %c0_i32 : i32, i32
  }
}

</mosaic_0001>

<llo_original>
// kernel: res_gated_graph_conv.4
$region0: #{res_gated_graph_conv.4}
  #allocation0 [shape = 'u32[]', space=smem, size = 0x4, offset = 0x4, fixed_abs, tag = 'smem constant byte address 0x4 - core index']
  #allocation1 [shape = 'u32[72,128]{1,0:T(1,128)}', space=vmem, size = 0x9000, scoped, tag = 'internal scratch']
  %s0 = inlined_call_operand.vmem [shape: f32[16,32], index: 0, kind: input, shape index: {}]
  %s1 = inlined_call_operand.vmem [shape: f32[32,128], index: 1, kind: input, shape index: {}]
  %s2 = inlined_call_operand.vmem [shape: f32[1,128], index: 2, kind: input, shape index: {}]
  %s3 = inlined_call_operand.vmem [shape: f32[16,128], index: 3, kind: output, shape index: {}]
  %s4 = sld [smem:[#allocation0]]
  $region45: #{res_gated_graph_conv.4} parent=0
    _
  %s6 = ssub.s32 1, %s4
  %s7 = scalar_select 0, %s6, %s4
  loop: start=0, step=1, limit=4
  $region2: #{res_gated_graph_conv.4} parent=0 // loop_pre_header
    _
  $region3: #{res_gated_graph_conv.4} parent=0 // loop_header
    %s9 = sphi 0, %s13
    %p10 = scmp.ge.s32.totalorder %s9, 4
    %s19 = sphi 0, %s21
    %s22 = sphi 0, %s19
    %s23 = sphi 0, %s22
    %s39 = sphi 0, %s23
    %s43 = sphi 0, %s43
    %s45 = sphi 0, %s43
    %s46 = sphi 0, %s45
    %s60 = sphi 0, %s46
    %s64 = sphi 0, %s64
    %s66 = sphi 0, %s64
    %s67 = sphi 0, %s66
    %s81 = sphi 0, %s67
    %s87 = sphi 0, %s89
    %s90 = sphi 0, %s87
    %s91 = sphi 0, %s90
    %s107 = sphi 0, %s91
  $region4: #{res_gated_graph_conv.4} parent=0 // loop_header_branch
    %12 = sbr.rel (%p10) target = $region8
  $region5: #{res_gated_graph_conv.4} parent=0 // loop_body
    %s14 = ssub.s32 %s9, 1
    %s15 = ssub.s32 %s9, 2
    %s16 = sadd.s32 %s9, 1
    %s17 = ssub.s32 %s9, %s16
    %p18 = scmp.eq.s32.totalorder %s17, 0
    %s20 = sadd.s32 %s19, 1
    %s21 = scalar_select %p18, %s19, %s20
    %p24 = pneg %p18
    %p25 = scmp.eq.s32.totalorder %s9, 1
    %p26 = por %p24, %p25
    %p27 = scmp.ne.s32.totalorder %s19, %s22
    %p28 = scmp.eq.s32.totalorder %s9, 0
    %p29 = por %p27, %p28
    %p30 = scmp.ne.s32.totalorder %s19, %s22
    %p31 = scmp.eq.s32.totalorder %s14, 1
    %p32 = por %p30, %p31
    %p33 = scmp.ne.s32.totalorder %s22, %s23
    %p34 = scmp.eq.s32.totalorder %s14, 0
    %p35 = por %p33, %p34
    %p36 = scmp.ne.s32.totalorder %s22, %s23
    %p37 = scmp.eq.s32.totalorder %s15, 1
    %p38 = por %p36, %p37
    %p40 = scmp.ne.s32.totalorder %s23, %s39
    %p41 = scmp.eq.s32.totalorder %s15, 0
    %p42 = por %p40, %p41
    %s44 = sadd.s32 %s43, 1
    %p47 = scmp.eq.s32.totalorder %s9, 1
    %p48 = scmp.ne.s32.totalorder %s43, %s45
    %p49 = scmp.eq.s32.totalorder %s9, 0
    %p50 = por %p48, %p49
    %p51 = scmp.ne.s32.totalorder %s43, %s45
    %p52 = scmp.eq.s32.totalorder %s14, 1
    %p53 = por %p51, %p52
    %p54 = scmp.ne.s32.totalorder %s45, %s46
    %p55 = scmp.eq.s32.totalorder %s14, 0
    %p56 = por %p54, %p55
    %p57 = scmp.ne.s32.totalorder %s45, %s46
    %p58 = scmp.eq.s32.totalorder %s15, 1
    %p59 = por %p57, %p58
    %p61 = scmp.ne.s32.totalorder %s46, %s60
    %p62 = scmp.eq.s32.totalorder %s15, 0
    %p63 = por %p61, %p62
    %s65 = sadd.s32 %s64, 1
    %p68 = scmp.eq.s32.totalorder %s9, 1
    %p69 = scmp.ne.s32.totalorder %s64, %s66
    %p70 = scmp.eq.s32.totalorder %s9, 0
    %p71 = por %p69, %p70
    %p72 = scmp.ne.s32.totalorder %s64, %s66
    %p73 = scmp.eq.s32.totalorder %s14, 1
    %p74 = por %p72, %p73
    %p75 = scmp.ne.s32.totalorder %s66, %s67
    %p76 = scmp.eq.s32.totalorder %s14, 0
    %p77 = por %p75, %p76
    %p78 = scmp.ne.s32.totalorder %s66, %s67
    %p79 = scmp.eq.s32.totalorder %s15, 1
    %p80 = por %p78, %p79
    %p82 = scmp.ne.s32.totalorder %s67, %s81
    %p83 = scmp.eq.s32.totalorder %s15, 0
    %p84 = por %p82, %p83
    %s85 = ssub.s32 %s9, %s16
    %p86 = scmp.eq.s32.totalorder %s85, 0
    %s88 = sadd.s32 %s87, 1
    %s89 = scalar_select %p86, %s87, %s88
    %p92 = pneg %p86
    %p93 = scmp.eq.s32.totalorder %s9, 1
    %p94 = por %p92, %p93
    %p95 = scmp.ne.s32.totalorder %s87, %s90
    %p96 = scmp.eq.s32.totalorder %s9, 0
    %p97 = por %p95, %p96
    %p98 = scmp.ne.s32.totalorder %s87, %s90
    %p99 = scmp.eq.s32.totalorder %s14, 1
    %p100 = por %p98, %p99
    %p101 = scmp.ne.s32.totalorder %s90, %s91
    %p102 = scmp.eq.s32.totalorder %s14, 0
    %p103 = por %p101, %p102
    %p104 = scmp.ne.s32.totalorder %s90, %s91
    %p105 = scmp.eq.s32.totalorder %s15, 1
    %p106 = por %p104, %p105
    %p108 = scmp.ne.s32.totalorder %s91, %s107
    %p109 = scmp.eq.s32.totalorder %s15, 0
    %p110 = por %p108, %p109
    %p111 = scmp.le.s32.totalorder 1, %s9
    %p112 = scmp.lt.s32.totalorder %s9, 3
    %p113 = pnand %p111, %p112
    %p114 = pneg %p113
    // Predicated region
    $region9: #{res_gated_graph_conv.4} parent=5 // pred_check
      _
    $region10: #{res_gated_graph_conv.4} parent=5 // pred_check_branch
      %116 = sbr.rel (%p113) target = $region12
    $region11: #{res_gated_graph_conv.4} parent=5 // pred_region
      %s117 = ssub.s32 %s9, 1
      // Predicated region
      $region13: #{res_gated_graph_conv.4} parent=11 // pred_check
        %p118 = pneg %p56
      $region14: #{res_gated_graph_conv.4} parent=11 // pred_check_branch
        %120 = sbr.rel (%p118) target = $region16
      $region15: #{res_gated_graph_conv.4} parent=11 // pred_region
        _
      $region16: #{res_gated_graph_conv.4} parent=11 // pred_fallthru
        _
      // Predicated region
      $region17: #{res_gated_graph_conv.4} parent=11 // pred_check
        %p121 = pneg %p77
      $region18: #{res_gated_graph_conv.4} parent=11 // pred_check_branch
        %123 = sbr.rel (%p121) target = $region20
      $region19: #{res_gated_graph_conv.4} parent=11 // pred_region
        _
      $region20: #{res_gated_graph_conv.4} parent=11 // pred_fallthru
        _
    $region12: #{res_gated_graph_conv.4} parent=5 // pred_fallthru
      _
    %p124 = scmp.lt.s32.totalorder %s9, 2
    // Predicated region
    $region21: #{res_gated_graph_conv.4} parent=5 // pred_check
      %p125 = pneg %p124
    $region22: #{res_gated_graph_conv.4} parent=5 // pred_check_branch
      %127 = sbr.rel (%p125) target = $region24
    $region23: #{res_gated_graph_conv.4} parent=5 // pred_region
      // Predicated region
      $region25: #{res_gated_graph_conv.4} parent=23 // pred_check
        %p128 = pneg %p29
      $region26: #{res_gated_graph_conv.4} parent=23 // pred_check_branch
        %130 = sbr.rel (%p128) target = $region28
      $region27: #{res_gated_graph_conv.4} parent=23 // pred_region
        %p131 = scmp.lt.s32.totalorder %s9, 1
        %s132 = scalar_select %p131, %s9, 1
        %s133 = smul.addr %s132, 8
        %s134 = scalar_lea.vmem %s0, %s133
      $region28: #{res_gated_graph_conv.4} parent=23 // pred_fallthru
        _
    $region24: #{res_gated_graph_conv.4} parent=5 // pred_fallthru
      _
    %p135 = scmp.le.s32.totalorder 1, %s9
    %p136 = scmp.lt.s32.totalorder %s9, 3
    %p137 = pnand %p135, %p136
    %p138 = pneg %p137
    // Predicated region
    $region29: #{res_gated_graph_conv.4} parent=5 // pred_check
      _
    $region30: #{res_gated_graph_conv.4} parent=5 // pred_check_branch
      %140 = sbr.rel (%p137) target = $region32
    $region31: #{res_gated_graph_conv.4} parent=5 // pred_region
      %s141 = ssub.s32 %s9, 1
      %p142 = scmp.lt.s32.totalorder %s14, 1
      %s143 = scalar_select %p142, %s14, 1
      %s144 = smul.addr %s143, 8
      %s145 = scalar_lea.vmem %s0, %s144
      %p146 = pneg %p35
      %p147 = pneg %p32
      %p148 = pneg %p56
      %p149 = pneg %p53
      %p150 = pneg %p77
      %p151 = pneg %p74
      %p152 = pneg %p103
      %p153 = pneg %p100
      %p154 = scmp.lt.s32.totalorder %s14, 1
      %s155 = scalar_select %p154, %s14, 1
      %s156 = smul.addr %s155, 8
      %s157 = scalar_lea.vmem %s3, %s156
      %p158 = scmp.lt.s32.totalorder %s14, 1
      %s159 = scalar_select %p158, %s14, 1
      %s160 = smul.addr %s159, 8
      %s161 = scalar_lea.vmem %s0, %s160
      %p162 = scmp.lt.s32.totalorder %s14, 1
      %s163 = scalar_select %p162, %s14, 1
      %s164 = smul.addr %s163, 8
      %s165 = scalar_lea.vmem %s3, %s164
      %v166 = vld [vmem:[%s161] sm:$0xff]
      %v167 = vld [vmem:[%s1] sm:$0xff]
      %v168 = vld [vmem:[%s1 + $0x8] sm:$0xff]
      %v169 = vld [vmem:[%s1 + $0x10] sm:$0xff]
      %v170 = vld [vmem:[%s1 + $0x18] sm:$0xff]
      %v171 = vld [vmem:[%s2] sm:$0x1]
      %v173 = vperm.slane %v171, 0
      %vm175 = vcmask 261120
      %v177 = vsel %vm175, %v166, 0
      %179 = vmatpush.msra.mxu0 0.0
      %180 = vmatpush.msra.mxu0 0.0
      %181 = vmatpush.msra.mxu0 0.0
      %182 = vmatpush.msra.mxu0 0.0
      %183 = vmatpush.msra.mxu0 0.0
      %184 = vmatpush.msra.mxu0 0.0
      %185 = vmatpush.msra.mxu0 0.0
      %186 = vmatpush.msra.mxu0 0.0
      %187 = vmatpush.msra.mxu0 0.0
      %188 = vmatpush.msra.mxu0 0.0
      %189 = vmatpush.msra.mxu0 0.0
      %190 = vmatpush.msra.mxu0 0.0
      %191 = vmatpush.msra.mxu0 %v170
      %192 = vmatpush.msra.mxu0 %v169
      %193 = vmatpush.msra.mxu0 %v168
      %194 = vmatpush.msra.mxu0 %v167
      %195 = vmatmul.f32.gmra.mxu0 %v177
      %v196 = vpop.f32.mrf.mxu0
      %v197 = vadd.f32 %v173, %v196
      %198 = vdwg.mxu0
      %199 = vst [vmem:[%s165] sm:$0xff] %v197
      %p200 = scmp.lt.s32.totalorder %s14, 1
      %s201 = scalar_select %p200, %s14, 1
      %s202 = smul.addr %s201, 8
      %s203 = scalar_lea.vmem %s3, %s202
      // Predicated region
      $region33: #{res_gated_graph_conv.4} parent=31 // pred_check
        %p204 = pneg %p100
      $region34: #{res_gated_graph_conv.4} parent=31 // pred_check_branch
        %206 = sbr.rel (%p204) target = $region36
      $region35: #{res_gated_graph_conv.4} parent=31 // pred_region
        _
      $region36: #{res_gated_graph_conv.4} parent=31 // pred_fallthru
        _
    $region32: #{res_gated_graph_conv.4} parent=5 // pred_fallthru
      _
    %p207 = scmp.le.s32.totalorder 2, %s9
    // Predicated region
    $region37: #{res_gated_graph_conv.4} parent=5 // pred_check
      %p208 = pneg %p207
    $region38: #{res_gated_graph_conv.4} parent=5 // pred_check_branch
      %210 = sbr.rel (%p208) target = $region40
    $region39: #{res_gated_graph_conv.4} parent=5 // pred_region
      %s211 = ssub.s32 %s9, 2
      // Predicated region
      $region41: #{res_gated_graph_conv.4} parent=39 // pred_check
        %p212 = pneg %p106
      $region42: #{res_gated_graph_conv.4} parent=39 // pred_check_branch
        %214 = sbr.rel (%p212) target = $region44
      $region43: #{res_gated_graph_conv.4} parent=39 // pred_region
        %p215 = scmp.lt.s32.totalorder %s15, 1
        %s216 = scalar_select %p215, %s15, 1
        %s217 = smul.addr %s216, 8
        %s218 = scalar_lea.vmem %s3, %s217
      $region44: #{res_gated_graph_conv.4} parent=39 // pred_fallthru
        _
    $region40: #{res_gated_graph_conv.4} parent=5 // pred_fallthru
      _
  $region6: #{res_gated_graph_conv.4} parent=0 // loop_footer
    %s13 = sadd.s32 1, %s9
  $region7: #{res_gated_graph_conv.4} parent=0 // loop_footer_branch
    %8 = sbr.rel target = $region3
  $region8: #{res_gated_graph_conv.4} parent=0 // loop_exit
    _

// kernel: res_gated_graph_conv.7
$region0: #{res_gated_graph_conv.7}
  #allocation0 [shape = 'u32[]', space=smem, size = 0x4, offset = 0x4, fixed_abs, tag = 'smem constant byte address 0x4 - core index']
  #allocation1 [shape = 'u32[72,128]{1,0:T(1,128)}', space=vmem, size = 0x9000, scoped, tag = 'internal scratch']
  %s0 = inlined_call_operand.vmem [shape: f32[32,32], index: 0, kind: input, shape index: {}]
  %s1 = inlined_call_operand.vmem [shape: f32[32,32], index: 1, kind: input, shape index: {}]
  %s2 = inlined_call_operand.vmem [shape: f32[2,32], index: 2, kind: input, shape index: {}]
  %s3 = inlined_call_operand.vmem [shape: f32[1,32], index: 3, kind: input, shape index: {}]
  %s4 = inlined_call_operand.vmem [shape: f32[1,32], index: 4, kind: input, shape index: {}]
  %s5 = inlined_call_operand.hbm [shape: f32[32,32], index: 5, kind: output, shape index: {}]
  %s6 = sld [smem:[#allocation0]]
  $region53: #{res_gated_graph_conv.7} parent=0
    _
  %s8 = ssub.s32 1, %s6
  %s9 = scalar_select 0, %s8, %s6
  $region1: #{res_gated_graph_conv.7} parent=0
    #allocation2 [shape = 'u8[16384]{0}', space=vmem, size = 0x4000, scoped, tag = 'output window, operand 0']
    #allocation3 [shape = 's32[2]{0}', space=sflag, size = 0x8, scoped, tag = 'scoped memory for res_gated_graph_conv.7']
    %10 = vsyncpa [#allocation3], 0
    %s11 = scalar_lea.sflag [#allocation3], 1
    %12 = vsyncpa %s11, 0
    loop: start=0, step=1, limit=4
    $region2: #{res_gated_graph_conv.7} parent=1 // loop_pre_header
      _
    $region3: #{res_gated_graph_conv.7} parent=1 // loop_header
      %s14 = sphi 0, %s18
      %p15 = scmp.ge.s32.totalorder %s14, 4
      %s24 = sphi 0, %s26
      %s27 = sphi 0, %s24
      %s28 = sphi 0, %s27
      %s44 = sphi 0, %s28
      %s50 = sphi 0, %s52
      %s53 = sphi 0, %s50
      %s54 = sphi 0, %s53
      %s70 = sphi 0, %s54
      %s74 = sphi 0, %s74
      %s76 = sphi 0, %s74
      %s77 = sphi 0, %s76
      %s91 = sphi 0, %s77
      %s95 = sphi 0, %s95
      %s97 = sphi 0, %s95
      %s98 = sphi 0, %s97
      %s112 = sphi 0, %s98
      %s116 = sphi 0, %s116
      %s118 = sphi 0, %s116
      %s119 = sphi 0, %s118
      %s133 = sphi 0, %s119
      %s139 = sphi 0, %s141
      %s142 = sphi 0, %s139
      %s143 = sphi 0, %s142
      %s159 = sphi 0, %s143
    $region4: #{res_gated_graph_conv.7} parent=1 // loop_header_branch
      %17 = sbr.rel (%p15) target = $region8
    $region5: #{res_gated_graph_conv.7} parent=1 // loop_body
      %s19 = ssub.s32 %s14, 1
      %s20 = ssub.s32 %s14, 2
      %s21 = sadd.s32 %s14, 1
      %s22 = ssub.s32 %s14, %s21
      %p23 = scmp.eq.s32.totalorder %s22, 0
      %s25 = sadd.s32 %s24, 1
      %s26 = scalar_select %p23, %s24, %s25
      %p29 = pneg %p23
      %p30 = scmp.eq.s32.totalorder %s14, 1
      %p31 = por %p29, %p30
      %p32 = scmp.ne.s32.totalorder %s24, %s27
      %p33 = scmp.eq.s32.totalorder %s14, 0
      %p34 = por %p32, %p33
      %p35 = scmp.ne.s32.totalorder %s24, %s27
      %p36 = scmp.eq.s32.totalorder %s19, 1
      %p37 = por %p35, %p36
      %p38 = scmp.ne.s32.totalorder %s27, %s28
      %p39 = scmp.eq.s32.totalorder %s19, 0
      %p40 = por %p38, %p39
      %p41 = scmp.ne.s32.totalorder %s27, %s28
      %p42 = scmp.eq.s32.totalorder %s20, 1
      %p43 = por %p41, %p42
      %p45 = scmp.ne.s32.totalorder %s28, %s44
      %p46 = scmp.eq.s32.totalorder %s20, 0
      %p47 = por %p45, %p46
      %s48 = ssub.s32 %s14, %s21
      %p49 = scmp.eq.s32.totalorder %s48, 0
      %s51 = sadd.s32 %s50, 1
      %s52 = scalar_select %p49, %s50, %s51
      %p55 = pneg %p49
      %p56 = scmp.eq.s32.totalorder %s14, 1
      %p57 = por %p55, %p56
      %p58 = scmp.ne.s32.totalorder %s50, %s53
      %p59 = scmp.eq.s32.totalorder %s14, 0
      %p60 = por %p58, %p59
      %p61 = scmp.ne.s32.totalorder %s50, %s53
      %p62 = scmp.eq.s32.totalorder %s19, 1
      %p63 = por %p61, %p62
      %p64 = scmp.ne.s32.totalorder %s53, %s54
      %p65 = scmp.eq.s32.totalorder %s19, 0
      %p66 = por %p64, %p65
      %p67 = scmp.ne.s32.totalorder %s53, %s54
      %p68 = scmp.eq.s32.totalorder %s20, 1
      %p69 = por %p67, %p68
      %p71 = scmp.ne.s32.totalorder %s54, %s70
      %p72 = scmp.eq.s32.totalorder %s20, 0
      %p73 = por %p71, %p72
      %s75 = sadd.s32 %s74, 1
      %p78 = scmp.eq.s32.totalorder %s14, 1
      %p79 = scmp.ne.s32.totalorder %s74, %s76
      %p80 = scmp.eq.s32.totalorder %s14, 0
      %p81 = por %p79, %p80
      %p82 = scmp.ne.s32.totalorder %s74, %s76
      %p83 = scmp.eq.s32.totalorder %s19, 1
      %p84 = por %p82, %p83
      %p85 = scmp.ne.s32.totalorder %s76, %s77
      %p86 = scmp.eq.s32.totalorder %s19, 0
      %p87 = por %p85, %p86
      %p88 = scmp.ne.s32.totalorder %s76, %s77
      %p89 = scmp.eq.s32.totalorder %s20, 1
      %p90 = por %p88, %p89
      %p92 = scmp.ne.s32.totalorder %s77, %s91
      %p93 = scmp.eq.s32.totalorder %s20, 0
      %p94 = por %p92, %p93
      %s96 = sadd.s32 %s95, 1
      %p99 = scmp.eq.s32.totalorder %s14, 1
      %p100 = scmp.ne.s32.totalorder %s95, %s97
      %p101 = scmp.eq.s32.totalorder %s14, 0
      %p102 = por %p100, %p101
      %p103 = scmp.ne.s32.totalorder %s95, %s97
      %p104 = scmp.eq.s32.totalorder %s19, 1
      %p105 = por %p103, %p104
      %p106 = scmp.ne.s32.totalorder %s97, %s98
      %p107 = scmp.eq.s32.totalorder %s19, 0
      %p108 = por %p106, %p107
      %p109 = scmp.ne.s32.totalorder %s97, %s98
      %p110 = scmp.eq.s32.totalorder %s20, 1
      %p111 = por %p109, %p110
      %p113 = scmp.ne.s32.totalorder %s98, %s112
      %p114 = scmp.eq.s32.totalorder %s20, 0
      %p115 = por %p113, %p114
      %s117 = sadd.s32 %s116, 1
      %p120 = scmp.eq.s32.totalorder %s14, 1
      %p121 = scmp.ne.s32.totalorder %s116, %s118
      %p122 = scmp.eq.s32.totalorder %s14, 0
      %p123 = por %p121, %p122
      %p124 = scmp.ne.s32.totalorder %s116, %s118
      %p125 = scmp.eq.s32.totalorder %s19, 1
      %p126 = por %p124, %p125
      %p127 = scmp.ne.s32.totalorder %s118, %s119
      %p128 = scmp.eq.s32.totalorder %s19, 0
      %p129 = por %p127, %p128
      %p130 = scmp.ne.s32.totalorder %s118, %s119
      %p131 = scmp.eq.s32.totalorder %s20, 1
      %p132 = por %p130, %p131
      %p134 = scmp.ne.s32.totalorder %s119, %s133
      %p135 = scmp.eq.s32.totalorder %s20, 0
      %p136 = por %p134, %p135
      %s137 = ssub.s32 %s14, %s21
      %p138 = scmp.eq.s32.totalorder %s137, 0
      %s140 = sadd.s32 %s139, 1
      %s141 = scalar_select %p138, %s139, %s140
      %p144 = pneg %p138
      %p145 = scmp.eq.s32.totalorder %s14, 1
      %p146 = por %p144, %p145
      %p147 = scmp.ne.s32.totalorder %s139, %s142
      %p148 = scmp.eq.s32.totalorder %s14, 0
      %p149 = por %p147, %p148
      %p150 = scmp.ne.s32.totalorder %s139, %s142
      %p151 = scmp.eq.s32.totalorder %s19, 1
      %p152 = por %p150, %p151
      %p153 = scmp.ne.s32.totalorder %s142, %s143
      %p154 = scmp.eq.s32.totalorder %s19, 0
      %p155 = por %p153, %p154
      %p156 = scmp.ne.s32.totalorder %s142, %s143
      %p157 = scmp.eq.s32.totalorder %s20, 1
      %p158 = por %p156, %p157
      %p160 = scmp.ne.s32.totalorder %s143, %s159
      %p161 = scmp.eq.s32.totalorder %s20, 0
      %p162 = por %p160, %p161
      %p163 = scmp.le.s32.totalorder 1, %s14
      %p164 = scmp.lt.s32.totalorder %s14, 3
      %p165 = pnand %p163, %p164
      %p166 = pneg %p165
      // Predicated region
      $region9: #{res_gated_graph_conv.7} parent=5 // pred_check
        _
      $region10: #{res_gated_graph_conv.7} parent=5 // pred_check_branch
        %168 = sbr.rel (%p165) target = $region12
      $region11: #{res_gated_graph_conv.7} parent=5 // pred_region
        %s169 = ssub.s32 %s14, 1
        // Predicated region
        $region13: #{res_gated_graph_conv.7} parent=11 // pred_check
          %p170 = pneg %p87
        $region14: #{res_gated_graph_conv.7} parent=11 // pred_check_branch
          %172 = sbr.rel (%p170) target = $region16
        $region15: #{res_gated_graph_conv.7} parent=11 // pred_region
          _
        $region16: #{res_gated_graph_conv.7} parent=11 // pred_fallthru
          _
        // Predicated region
        $region17: #{res_gated_graph_conv.7} parent=11 // pred_check
          %p173 = pneg %p108
        $region18: #{res_gated_graph_conv.7} parent=11 // pred_check_branch
          %175 = sbr.rel (%p173) target = $region20
        $region19: #{res_gated_graph_conv.7} parent=11 // pred_region
          _
        $region20: #{res_gated_graph_conv.7} parent=11 // pred_fallthru
          _
        // Predicated region
        $region21: #{res_gated_graph_conv.7} parent=11 // pred_check
          %p176 = pneg %p129
        $region22: #{res_gated_graph_conv.7} parent=11 // pred_check_branch
          %178 = sbr.rel (%p176) target = $region24
        $region23: #{res_gated_graph_conv.7} parent=11 // pred_region
          _
        $region24: #{res_gated_graph_conv.7} parent=11 // pred_fallthru
          _
      $region12: #{res_gated_graph_conv.7} parent=5 // pred_fallthru
        _
      %p179 = scmp.lt.s32.totalorder %s14, 2
      // Predicated region
      $region25: #{res_gated_graph_conv.7} parent=5 // pred_check
        %p180 = pneg %p179
      $region26: #{res_gated_graph_conv.7} parent=5 // pred_check_branch
        %182 = sbr.rel (%p180) target = $region28
      $region27: #{res_gated_graph_conv.7} parent=5 // pred_region
        // Predicated region
        $region29: #{res_gated_graph_conv.7} parent=27 // pred_check
          %p183 = pneg %p34
        $region30: #{res_gated_graph_conv.7} parent=27 // pred_check_branch
          %185 = sbr.rel (%p183) target = $region32
        $region31: #{res_gated_graph_conv.7} parent=27 // pred_region
          %s186 = smul.u32 2, %s14
          %p187 = scmp.lt.s32.totalorder %s186, 3
          %s188 = scalar_select %p187, %s186, 3
          %s189 = smul.addr %s188, 8
          %s190 = scalar_lea.vmem %s0, %s189
          %s191 = smul.u32 2, %s14
        $region32: #{res_gated_graph_conv.7} parent=27 // pred_fallthru
          _
        // Predicated region
        $region33: #{res_gated_graph_conv.7} parent=27 // pred_check
          %p192 = pneg %p60
        $region34: #{res_gated_graph_conv.7} parent=27 // pred_check_branch
          %194 = sbr.rel (%p192) target = $region36
        $region35: #{res_gated_graph_conv.7} parent=27 // pred_region
          %s195 = smul.u32 2, %s14
          %p196 = scmp.lt.s32.totalorder %s195, 3
          %s197 = scalar_select %p196, %s195, 3
          %s198 = smul.addr %s197, 8
          %s199 = scalar_lea.vmem %s1, %s198
          %s200 = smul.u32 2, %s14
        $region36: #{res_gated_graph_conv.7} parent=27 // pred_fallthru
          _
      $region28: #{res_gated_graph_conv.7} parent=5 // pred_fallthru
        _
      %p201 = scmp.le.s32.totalorder 1, %s14
      %p202 = scmp.lt.s32.totalorder %s14, 3
      %p203 = pnand %p201, %p202
      %p204 = pneg %p203
      // Predicated region
      $region37: #{res_gated_graph_conv.7} parent=5 // pred_check
        _
      $region38: #{res_gated_graph_conv.7} parent=5 // pred_check_branch
        %206 = sbr.rel (%p203) target = $region40
      $region39: #{res_gated_graph_conv.7} parent=5 // pred_region
        %s207 = ssub.s32 %s14, 1
        %s208 = smul.u32 2, %s19
        %p209 = scmp.lt.s32.totalorder %s208, 3
        %s210 = scalar_select %p209, %s208, 3
        %s211 = smul.addr %s210, 8
        %s212 = scalar_lea.vmem %s0, %s211
        %p213 = pneg %p40
        %p214 = pneg %p37
        %s215 = smul.u32 2, %s19
        %p216 = scmp.lt.s32.totalorder %s215, 3
        %s217 = scalar_select %p216, %s215, 3
        %s218 = smul.addr %s217, 8
        %s219 = scalar_lea.vmem %s1, %s218
        %p220 = pneg %p66
        %p221 = pneg %p63
        %p222 = pneg %p87
        %p223 = pneg %p84
        %p224 = pneg %p108
        %p225 = pneg %p105
        %p226 = pneg %p129
        %p227 = pneg %p126
        %p228 = pneg %p155
        %p229 = pneg %p152
        %s230 = sand.u32 %s142, 1
        %s231 = scalar_lea.sflag [#allocation3], %s230
        %s232 = sand.u32 %s142, 1
        %s233 = smul.addr %s232, 16
        %s234 = scalar_lea.vmem [#allocation2], %s233
        %s235 = smul.u32 2, %s19
        %p236 = scmp.lt.s32.totalorder %s235, 3
        %s237 = scalar_select %p236, %s235, 3
        %s238 = smul.addr %s237, 8
        %s239 = scalar_lea.vmem %s0, %s238
        %s240 = smul.u32 2, %s19
        %s241 = smul.u32 2, %s19
        %p242 = scmp.lt.s32.totalorder %s241, 3
        %s243 = scalar_select %p242, %s241, 3
        %s244 = smul.addr %s243, 8
        %s245 = scalar_lea.vmem %s1, %s244
        %s246 = smul.u32 2, %s19
        %s247 = smul.u32 2, %s19
        %v248 = vld [vmem:[%s2] sm:$0x1]
        %v249 = vmul.f32 %v248, 0.03125
        %v250 = vld [vmem:[%s2 + $0x1] sm:$0x1]
        %v251 = vmul.f32 %v250, 0.03125
        %v252 = vmul.f32 %v249, %v249
        %v253 = vsub.f32 %v251, %v252
        %v254 = vld [vmem:[%s239] sm:$0xff]
        %v255 = vld [vmem:[%s239 + $0x8] sm:$0xff]
        %v256 = vperm.slane %v249, 0
        %v257 = vsub.f32 %v254, %v256
        %v258 = vsub.f32 %v255, %v256
        %v259 = vadd.f32 %v253, 1e-05
        %v260 = vrsqrt.pop %v259
        %v261 = vmul.f32 %v260, %v259
        %v262 = vmul.f32 %v261, %v260
        %v263 = vmul.f32 0.5, %v262
        %v264 = vsub.f32 1.5, %v263
        %v265 = vmul.f32 %v260, %v264
        %vm266 = vweird.f32 %v259
        %vm267 = vweird.f32 %v260
        %vm268 = vmor %vm266, %vm267
        %v269 = vsel %vm268, %v260, %v265
        %v270 = vperm.slane %v269, 0
        %v271 = vmul.f32 %v257, %v270
        %v272 = vmul.f32 %v258, %v270
        %v273 = vld [vmem:[%s3] sm:$0x1]
        %v275 = vperm.slane %v273, 0
        %v277 = vmul.f32 %v271, %v275
        %v278 = vmul.f32 %v272, %v275
        %v279 = vld [vmem:[%s4] sm:$0x1]
        %v281 = vperm.slane %v279, 0
        %v283 = vadd.f32 %v277, %v281
        %v284 = vadd.f32 %v278, %v281
        %v285 = vmax.f32 %v283, 0.0
        %v286 = vmax.f32 %v284, 0.0
        %v287 = vld [vmem:[%s245] sm:$0xff]
        %v288 = vld [vmem:[%s245 + $0x8] sm:$0xff]
        %v289 = vadd.f32 %v287, %v285
        %v290 = vadd.f32 %v288, %v286
        %vm291 = vcmask 261120
        %292 = vst.msk [vmem:[%s234] sm:$0xff] %vm291, %v289
        %293 = vst.msk [vmem:[%s234 + $0x8] sm:$0xff] %vm291, %v290
        %s294 = sand.u32 %s142, 1
        %s295 = scalar_lea.sflag [#allocation3], %s294
        %s296 = sand.u32 %s142, 1
        %s297 = smul.addr %s296, 16
        %s298 = scalar_lea.vmem [#allocation2], %s297
        // Predicated region
        $region41: #{res_gated_graph_conv.7} parent=39 // pred_check
          %p299 = pneg %p152
        $region42: #{res_gated_graph_conv.7} parent=39 // pred_check_branch
          %301 = sbr.rel (%p299) target = $region44
        $region43: #{res_gated_graph_conv.7} parent=39 // pred_region
          %s302 = smul.u32 2, %s19
          %304 = vsyncadd %s295, 0
          %s305 = smul.addr %s302, 8
          %s306 = scalar_lea.hbm %s5, %s305
          %s307 = sshll.u32 %s298, 4
          %s308 = int_to_ptr.vmem [resolvable:$true] %s307
          %s309 = sshll.u32 %s306, 4
          %s310 = int_to_ptr.hbm [resolvable:$true] %s309
          %315 = dma.vmem_to_hbm [thread:$0]  %s308, 256, %s310, %s295, 128, 128, 8
        $region44: #{res_gated_graph_conv.7} parent=39 // pred_fallthru
          _
      $region40: #{res_gated_graph_conv.7} parent=5 // pred_fallthru
        _
      %p316 = scmp.le.s32.totalorder 2, %s14
      // Predicated region
      $region45: #{res_gated_graph_conv.7} parent=5 // pred_check
        %p317 = pneg %p316
      $region46: #{res_gated_graph_conv.7} parent=5 // pred_check_branch
        %319 = sbr.rel (%p317) target = $region48
      $region47: #{res_gated_graph_conv.7} parent=5 // pred_region
        %s320 = ssub.s32 %s14, 2
        // Predicated region
        $region49: #{res_gated_graph_conv.7} parent=47 // pred_check
          %p321 = pneg %p158
        $region50: #{res_gated_graph_conv.7} parent=47 // pred_check_branch
          %323 = sbr.rel (%p321) target = $region52
        $region51: #{res_gated_graph_conv.7} parent=47 // pred_region
          %s324 = sand.u32 %s143, 1
          %s325 = scalar_lea.sflag [#allocation3], %s324
          %s326 = sand.u32 %s143, 1
          %s327 = smul.addr %s326, 16
          %s328 = scalar_lea.vmem [#allocation2], %s327
          %330 = dma.done %s325, 256
        $region52: #{res_gated_graph_conv.7} parent=47 // pred_fallthru
          _
      $region48: #{res_gated_graph_conv.7} parent=5 // pred_fallthru
        _
    $region6: #{res_gated_graph_conv.7} parent=1 // loop_footer
      %s18 = sadd.s32 1, %s14
    $region7: #{res_gated_graph_conv.7} parent=1 // loop_footer_branch
      %13 = sbr.rel target = $region3
    $region8: #{res_gated_graph_conv.7} parent=1 // loop_exit
      _
    %331 = vsyncpa [#allocation3], 1
    %s332 = scalar_lea.sflag [#allocation3], 1
    %333 = vsyncpa %s332, 1

// kernel: res_gated_graph_conv.5
$region0: #{res_gated_graph_conv.5}
  #allocation0 [shape = 'u32[]', space=smem, size = 0x4, offset = 0x4, fixed_abs, tag = 'smem constant byte address 0x4 - core index']
  #allocation1 [shape = 'u32[72,128]{1,0:T(1,128)}', space=vmem, size = 0x9000, scoped, tag = 'internal scratch']
  #allocation2 [shape = 'f32[16,128]{1,0:T(8,128)}', space=vmem, size = 0x2000, scoped, tag = 'scratch operand']
  #allocation3 [shape = 'f32[16,128]{1,0:T(8,128)}', space=vmem, size = 0x2000, scoped, tag = 'scratch operand']
  #allocation4 [shape = 'f32[16,64]{1,0:T(8,128)}', space=vmem, size = 0x2000, scoped, tag = 'scratch operand']
  #allocation5 [shape = 's32[1]{0}', space=sflag, size = 0x4, scoped, tag = 'scoped memory for res_gated_graph_conv.5']
  #allocation6 [shape = 'u8[512]{0}', space=smem, size = 0x200, scoped, tag = 'prefetched SMEM operand 0']
  #allocation7 [shape = 'u8[512]{0}', space=smem, size = 0x200, scoped, tag = 'prefetched SMEM operand 1']
  %s0 = inlined_call_operand.vmem [shape: s32[32], index: 0, kind: input, shape index: {}]
  %s1 = inlined_call_operand.vmem [shape: s32[32], index: 1, kind: input, shape index: {}]
  %s2 = inlined_call_operand.vmem [shape: f32[32,32], index: 2, kind: input, shape index: {}]
  %s3 = inlined_call_operand.vmem [shape: f32[16,128], index: 3, kind: input, shape index: {}]
  %s4 = inlined_call_operand.vmem [shape: f32[32,32], index: 4, kind: input, shape index: {}]
  %s5 = inlined_call_operand.vmem [shape: f32[1,32], index: 5, kind: input, shape index: {}]
  %s6 = inlined_call_operand.vmem [shape: f32[32,32], index: 6, kind: output, shape index: {0}]
  %s7 = inlined_call_operand.vmem [shape: f32[16,64], index: 7, kind: output, shape index: {1}]
  %s8 = inlined_call_operand.vmem [shape: f32[2,32], index: 8, kind: output, shape index: {2}]
  %9 = xla_tuple %s6, %s7, %s8
  %s10 = sld [smem:[#allocation0]]
  $region87: #{res_gated_graph_conv.5} parent=0
    _
  %s12 = ssub.s32 1, %s10
  %s13 = scalar_select 0, %s12, %s10
  %s15 = sshll.u32 %s0, 4
  %s16 = int_to_ptr.vmem [resolvable:$true] %s15
  %18 = dma.vmem_to_smem %s16, 16, [#allocation6], [#allocation5]
  %s20 = sshll.u32 %s1, 4
  %s21 = int_to_ptr.vmem [resolvable:$true] %s20
  %23 = dma.vmem_to_smem %s21, 16, [#allocation7], [#allocation5]
  %25 = dma.done [#allocation5], 32
  %26 = sfence
  loop: start=0, step=1, limit=4
  $region2: #{res_gated_graph_conv.5} parent=0 // loop_pre_header
    _
  $region3: #{res_gated_graph_conv.5} parent=0 // loop_header
    %s28 = sphi 0, %s32
    %p29 = scmp.ge.s32.totalorder %s28, 4
    %s38 = sphi 0, %s40
    %s41 = sphi 0, %s38
    %s42 = sphi 0, %s41
    %s58 = sphi 0, %s42
    %s62 = sphi 0, %s62
    %s64 = sphi 0, %s62
    %s65 = sphi 0, %s64
    %s79 = sphi 0, %s65
    %s83 = sphi 0, %s83
    %s85 = sphi 0, %s83
    %s86 = sphi 0, %s85
    %s100 = sphi 0, %s86
    %s104 = sphi 0, %s104
    %s106 = sphi 0, %s104
    %s107 = sphi 0, %s106
    %s121 = sphi 0, %s107
    %s127 = sphi 0, %s129
    %s130 = sphi 0, %s127
    %s131 = sphi 0, %s130
    %s147 = sphi 0, %s131
    %s151 = sphi 0, %s151
    %s153 = sphi 0, %s151
    %s154 = sphi 0, %s153
    %s168 = sphi 0, %s154
    %s172 = sphi 0, %s172
    %s174 = sphi 0, %s172
    %s175 = sphi 0, %s174
    %s189 = sphi 0, %s175
  $region4: #{res_gated_graph_conv.5} parent=0 // loop_header_branch
    %31 = sbr.rel (%p29) target = $region8
  $region5: #{res_gated_graph_conv.5} parent=0 // loop_body
    %s33 = ssub.s32 %s28, 1
    %s34 = ssub.s32 %s28, 2
    %s35 = sadd.s32 %s28, 1
    %s36 = ssub.s32 %s28, %s35
    %p37 = scmp.eq.s32.totalorder %s36, 0
    %s39 = sadd.s32 %s38, 1
    %s40 = scalar_select %p37, %s38, %s39
    %p43 = pneg %p37
    %p44 = scmp.eq.s32.totalorder %s28, 1
    %p45 = por %p43, %p44
    %p46 = scmp.ne.s32.totalorder %s38, %s41
    %p47 = scmp.eq.s32.totalorder %s28, 0
    %p48 = por %p46, %p47
    %p49 = scmp.ne.s32.totalorder %s38, %s41
    %p50 = scmp.eq.s32.totalorder %s33, 1
    %p51 = por %p49, %p50
    %p52 = scmp.ne.s32.totalorder %s41, %s42
    %p53 = scmp.eq.s32.totalorder %s33, 0
    %p54 = por %p52, %p53
    %p55 = scmp.ne.s32.totalorder %s41, %s42
    %p56 = scmp.eq.s32.totalorder %s34, 1
    %p57 = por %p55, %p56
    %p59 = scmp.ne.s32.totalorder %s42, %s58
    %p60 = scmp.eq.s32.totalorder %s34, 0
    %p61 = por %p59, %p60
    %s63 = sadd.s32 %s62, 1
    %p66 = scmp.eq.s32.totalorder %s28, 1
    %p67 = scmp.ne.s32.totalorder %s62, %s64
    %p68 = scmp.eq.s32.totalorder %s28, 0
    %p69 = por %p67, %p68
    %p70 = scmp.ne.s32.totalorder %s62, %s64
    %p71 = scmp.eq.s32.totalorder %s33, 1
    %p72 = por %p70, %p71
    %p73 = scmp.ne.s32.totalorder %s64, %s65
    %p74 = scmp.eq.s32.totalorder %s33, 0
    %p75 = por %p73, %p74
    %p76 = scmp.ne.s32.totalorder %s64, %s65
    %p77 = scmp.eq.s32.totalorder %s34, 1
    %p78 = por %p76, %p77
    %p80 = scmp.ne.s32.totalorder %s65, %s79
    %p81 = scmp.eq.s32.totalorder %s34, 0
    %p82 = por %p80, %p81
    %s84 = sadd.s32 %s83, 1
    %p87 = scmp.eq.s32.totalorder %s28, 1
    %p88 = scmp.ne.s32.totalorder %s83, %s85
    %p89 = scmp.eq.s32.totalorder %s28, 0
    %p90 = por %p88, %p89
    %p91 = scmp.ne.s32.totalorder %s83, %s85
    %p92 = scmp.eq.s32.totalorder %s33, 1
    %p93 = por %p91, %p92
    %p94 = scmp.ne.s32.totalorder %s85, %s86
    %p95 = scmp.eq.s32.totalorder %s33, 0
    %p96 = por %p94, %p95
    %p97 = scmp.ne.s32.totalorder %s85, %s86
    %p98 = scmp.eq.s32.totalorder %s34, 1
    %p99 = por %p97, %p98
    %p101 = scmp.ne.s32.totalorder %s86, %s100
    %p102 = scmp.eq.s32.totalorder %s34, 0
    %p103 = por %p101, %p102
    %s105 = sadd.s32 %s104, 1
    %p108 = scmp.eq.s32.totalorder %s28, 1
    %p109 = scmp.ne.s32.totalorder %s104, %s106
    %p110 = scmp.eq.s32.totalorder %s28, 0
    %p111 = por %p109, %p110
    %p112 = scmp.ne.s32.totalorder %s104, %s106
    %p113 = scmp.eq.s32.totalorder %s33, 1
    %p114 = por %p112, %p113
    %p115 = scmp.ne.s32.totalorder %s106, %s107
    %p116 = scmp.eq.s32.totalorder %s33, 0
    %p117 = por %p115, %p116
    %p118 = scmp.ne.s32.totalorder %s106, %s107
    %p119 = scmp.eq.s32.totalorder %s34, 1
    %p120 = por %p118, %p119
    %p122 = scmp.ne.s32.totalorder %s107, %s121
    %p123 = scmp.eq.s32.totalorder %s34, 0
    %p124 = por %p122, %p123
    %s125 = ssub.s32 %s28, %s35
    %p126 = scmp.eq.s32.totalorder %s125, 0
    %s128 = sadd.s32 %s127, 1
    %s129 = scalar_select %p126, %s127, %s128
    %p132 = pneg %p126
    %p133 = scmp.eq.s32.totalorder %s28, 1
    %p134 = por %p132, %p133
    %p135 = scmp.ne.s32.totalorder %s127, %s130
    %p136 = scmp.eq.s32.totalorder %s28, 0
    %p137 = por %p135, %p136
    %p138 = scmp.ne.s32.totalorder %s127, %s130
    %p139 = scmp.eq.s32.totalorder %s33, 1
    %p140 = por %p138, %p139
    %p141 = scmp.ne.s32.totalorder %s130, %s131
    %p142 = scmp.eq.s32.totalorder %s33, 0
    %p143 = por %p141, %p142
    %p144 = scmp.ne.s32.totalorder %s130, %s131
    %p145 = scmp.eq.s32.totalorder %s34, 1
    %p146 = por %p144, %p145
    %p148 = scmp.ne.s32.totalorder %s131, %s147
    %p149 = scmp.eq.s32.totalorder %s34, 0
    %p150 = por %p148, %p149
    %s152 = sadd.s32 %s151, 1
    %p155 = scmp.eq.s32.totalorder %s28, 1
    %p156 = scmp.ne.s32.totalorder %s151, %s153
    %p157 = scmp.eq.s32.totalorder %s28, 0
    %p158 = por %p156, %p157
    %p159 = scmp.ne.s32.totalorder %s151, %s153
    %p160 = scmp.eq.s32.totalorder %s33, 1
    %p161 = por %p159, %p160
    %p162 = scmp.ne.s32.totalorder %s153, %s154
    %p163 = scmp.eq.s32.totalorder %s33, 0
    %p164 = por %p162, %p163
    %p165 = scmp.ne.s32.totalorder %s153, %s154
    %p166 = scmp.eq.s32.totalorder %s34, 1
    %p167 = por %p165, %p166
    %p169 = scmp.ne.s32.totalorder %s154, %s168
    %p170 = scmp.eq.s32.totalorder %s34, 0
    %p171 = por %p169, %p170
    %s173 = sadd.s32 %s172, 1
    %p176 = scmp.eq.s32.totalorder %s28, 1
    %p177 = scmp.ne.s32.totalorder %s172, %s174
    %p178 = scmp.eq.s32.totalorder %s28, 0
    %p179 = por %p177, %p178
    %p180 = scmp.ne.s32.totalorder %s172, %s174
    %p181 = scmp.eq.s32.totalorder %s33, 1
    %p182 = por %p180, %p181
    %p183 = scmp.ne.s32.totalorder %s174, %s175
    %p184 = scmp.eq.s32.totalorder %s33, 0
    %p185 = por %p183, %p184
    %p186 = scmp.ne.s32.totalorder %s174, %s175
    %p187 = scmp.eq.s32.totalorder %s34, 1
    %p188 = por %p186, %p187
    %p190 = scmp.ne.s32.totalorder %s175, %s189
    %p191 = scmp.eq.s32.totalorder %s34, 0
    %p192 = por %p190, %p191
    %p193 = scmp.le.s32.totalorder 1, %s28
    %p194 = scmp.lt.s32.totalorder %s28, 3
    %p195 = pnand %p193, %p194
    %p196 = pneg %p195
    // Predicated region
    $region9: #{res_gated_graph_conv.5} parent=5 // pred_check
      _
    $region10: #{res_gated_graph_conv.5} parent=5 // pred_check_branch
      %198 = sbr.rel (%p195) target = $region12
    $region11: #{res_gated_graph_conv.5} parent=5 // pred_region
      %s199 = ssub.s32 %s28, 1
      // Predicated region
      $region13: #{res_gated_graph_conv.5} parent=11 // pred_check
        %p200 = pneg %p75
      $region14: #{res_gated_graph_conv.5} parent=11 // pred_check_branch
        %202 = sbr.rel (%p200) target = $region16
      $region15: #{res_gated_graph_conv.5} parent=11 // pred_region
        _
      $region16: #{res_gated_graph_conv.5} parent=11 // pred_fallthru
        _
      // Predicated region
      $region17: #{res_gated_graph_conv.5} parent=11 // pred_check
        %p203 = pneg %p96
      $region18: #{res_gated_graph_conv.5} parent=11 // pred_check_branch
        %205 = sbr.rel (%p203) target = $region20
      $region19: #{res_gated_graph_conv.5} parent=11 // pred_region
        _
      $region20: #{res_gated_graph_conv.5} parent=11 // pred_fallthru
        _
      // Predicated region
      $region21: #{res_gated_graph_conv.5} parent=11 // pred_check
        %p206 = pneg %p117
      $region22: #{res_gated_graph_conv.5} parent=11 // pred_check_branch
        %208 = sbr.rel (%p206) target = $region24
      $region23: #{res_gated_graph_conv.5} parent=11 // pred_region
        _
      $region24: #{res_gated_graph_conv.5} parent=11 // pred_fallthru
        _
    $region12: #{res_gated_graph_conv.5} parent=5 // pred_fallthru
      _
    %p209 = scmp.lt.s32.totalorder %s28, 2
    // Predicated region
    $region25: #{res_gated_graph_conv.5} parent=5 // pred_check
      %p210 = pneg %p209
    $region26: #{res_gated_graph_conv.5} parent=5 // pred_check_branch
      %212 = sbr.rel (%p210) target = $region28
    $region27: #{res_gated_graph_conv.5} parent=5 // pred_region
      // Predicated region
      $region29: #{res_gated_graph_conv.5} parent=27 // pred_check
        %p213 = pneg %p48
      $region30: #{res_gated_graph_conv.5} parent=27 // pred_check_branch
        %215 = sbr.rel (%p213) target = $region32
      $region31: #{res_gated_graph_conv.5} parent=27 // pred_region
        %s216 = smul.u32 2, %s28
        %p217 = scmp.lt.s32.totalorder %s216, 3
        %s218 = scalar_select %p217, %s216, 3
        %s219 = smul.addr %s218, 8
        %s220 = scalar_lea.vmem %s2, %s219
        %s221 = smul.u32 2, %s28
      $region32: #{res_gated_graph_conv.5} parent=27 // pred_fallthru
        _
    $region28: #{res_gated_graph_conv.5} parent=5 // pred_fallthru
      _
    %p222 = scmp.le.s32.totalorder 1, %s28
    %p223 = scmp.lt.s32.totalorder %s28, 3
    %p224 = pnand %p222, %p223
    %p225 = pneg %p224
    // Predicated region
    $region33: #{res_gated_graph_conv.5} parent=5 // pred_check
      _
    $region34: #{res_gated_graph_conv.5} parent=5 // pred_check_branch
      %227 = sbr.rel (%p224) target = $region36
    $region35: #{res_gated_graph_conv.5} parent=5 // pred_region
      %s228 = ssub.s32 %s28, 1
      %s229 = smul.u32 2, %s33
      %p230 = scmp.lt.s32.totalorder %s229, 3
      %s231 = scalar_select %p230, %s229, 3
      %s232 = smul.addr %s231, 8
      %s233 = scalar_lea.vmem %s2, %s232
      %p234 = pneg %p54
      %p235 = pneg %p51
      %p236 = pneg %p75
      %p237 = pneg %p72
      %p238 = pneg %p96
      %p239 = pneg %p93
      %p240 = pneg %p117
      %p241 = pneg %p114
      %p242 = pneg %p143
      %p243 = pneg %p140
      %s244 = smul.u32 2, %s33
      %p245 = scmp.lt.s32.totalorder %s244, 3
      %s246 = scalar_select %p245, %s244, 3
      %s247 = smul.addr %s246, 8
      %s248 = scalar_lea.vmem %s6, %s247
      %p249 = pneg %p164
      %p250 = pneg %p161
      %p251 = pneg %p185
      %p252 = pneg %p182
      %s253 = smul.u32 2, %s33
      %p254 = scmp.lt.s32.totalorder %s253, 3
      %s255 = scalar_select %p254, %s253, 3
      %s256 = smul.addr %s255, 8
      %s257 = scalar_lea.vmem %s2, %s256
      %s258 = smul.u32 2, %s33
      %s259 = smul.u32 2, %s33
      %p260 = scmp.lt.s32.totalorder %s259, 3
      %s261 = scalar_select %p260, %s259, 3
      %s262 = smul.addr %s261, 8
      %s263 = scalar_lea.vmem %s6, %s262
      %s264 = smul.u32 2, %s33
      %s265 = smul.u32 %s33, 16
      %p266 = scmp.eq.s32.totalorder %s33, 0
      // Predicated region
      $region37: #{res_gated_graph_conv.5} parent=35 // pred_check
        %p267 = pneg %p266
      $region38: #{res_gated_graph_conv.5} parent=35 // pred_check_branch
        %269 = sbr.rel (%p267) target = $region40
      $region39: #{res_gated_graph_conv.5} parent=35 // pred_region
        %vm270 = vcmask 523264
        %271 = vst.msk [vmem:[%s7] sm:$0xff] %vm270, 0.0
        %272 = vst.msk [vmem:[%s7 + $0x8] sm:$0xff] %vm270, 0.0
        %vm273 = vcmask 254976
        %274 = vst.msk [vmem:[%s8] sm:$0x3] %vm273, 0.0
      $region40: #{res_gated_graph_conv.5} parent=35 // pred_fallthru
        _
      loop: start=0, step=1, limit=16
      $region41: #{res_gated_graph_conv.5} parent=35 // loop_pre_header
        _
      $region42: #{res_gated_graph_conv.5} parent=35 // loop_header
        %s276 = sphi 0, %s280
        %p277 = scmp.ge.s32.totalorder %s276, 16
      $region43: #{res_gated_graph_conv.5} parent=35 // loop_header_branch
        %279 = sbr.rel (%p277) target = $region47
      $region44: #{res_gated_graph_conv.5} parent=35 // loop_body
        %s281 = sadd.s32 %s265, %s276
        %s282 = sld [smem:[#allocation6 + %s281]]
        %s283 = sld [smem:[#allocation7 + %s281]]
        %s284 = scalar_lea.vmem %s3, %s282
        %v285 = vld [vmem:[%s284] sm:$0x1]
        %s286 = scalar_lea.vmem [#allocation2], %s276
        %287 = vst [vmem:[%s286] sm:$0x1] %v285
        %s288 = scalar_lea.vmem %s3, %s283
        %v289 = vld [vmem:[%s288] sm:$0x1]
        %s290 = scalar_lea.vmem [#allocation3], %s276
        %291 = vst [vmem:[%s290] sm:$0x1] %v289
      $region45: #{res_gated_graph_conv.5} parent=35 // loop_footer
        %s280 = sadd.s32 1, %s276
      $region46: #{res_gated_graph_conv.5} parent=35 // loop_footer_branch
        %275 = sbr.rel target = $region42
      $region47: #{res_gated_graph_conv.5} parent=35 // loop_exit
        _
      %v292 = vld [vmem:[%s257] sm:$0xff]
      %v293 = vld [vmem:[%s257 + $0x8] sm:$0xff]
      %v294 = vld [vmem:[%s4] sm:$0xff]
      %v295 = vld [vmem:[%s4 + $0x8] sm:$0xff]
      %v296 = vld [vmem:[%s4 + $0x10] sm:$0xff]
      %v297 = vld [vmem:[%s4 + $0x18] sm:$0xff]
      %v298 = vld [vmem:[%s5] sm:$0x1]
      %v300 = vperm.slane %v298, 0
      %vm302 = vcmask 261120
      %v304 = vsel %vm302, %v292, 0
      %v307 = vsel %vm302, %v293, 0
      %309 = vmatpush.msra.mxu0 0.0
      %310 = vmatpush.msra.mxu0 0.0
      %311 = vmatpush.msra.mxu0 0.0
      %312 = vmatpush.msra.mxu0 0.0
      %313 = vmatpush.msra.mxu0 0.0
      %314 = vmatpush.msra.mxu0 0.0
      %315 = vmatpush.msra.mxu0 0.0
      %316 = vmatpush.msra.mxu0 0.0
      %317 = vmatpush.msra.mxu0 0.0
      %318 = vmatpush.msra.mxu0 0.0
      %319 = vmatpush.msra.mxu0 0.0
      %320 = vmatpush.msra.mxu0 0.0
      %321 = vmatpush.msra.mxu0 %v297
      %322 = vmatpush.msra.mxu0 %v296
      %323 = vmatpush.msra.mxu0 %v295
      %324 = vmatpush.msra.mxu0 %v294
      %325 = vmatmul.f32.gmra.mxu0 %v304
      %v326 = vpop.f32.mrf.mxu0
      %v327 = vadd.f32 %v300, %v326
      %328 = vmatmul.f32.gmra.mxu0 %v307
      %v329 = vpop.f32.mrf.mxu0
      %v330 = vadd.f32 %v300, %v329
      %331 = vdwg.mxu0
      %v332 = vld [vmem:[#allocation2] sm:$0xff]
      %v333 = vld [vmem:[#allocation2 + $0x8] sm:$0xff]
      %v334 = vld [vmem:[#allocation3] sm:$0xff]
      %v335 = vld [vmem:[#allocation3 + $0x8] sm:$0xff]
      %338 = vrot.lane.b32.xlu0 %v334, 96
      %v339 = vpop.permute.xlu0 %338
      %340 = vrot.lane.b32.xlu0 %v335, 96
      %v341 = vpop.permute.xlu0 %340
      %v344 = vadd.f32 %v332, %v339
      %v345 = vadd.f32 %v333, %v341
      %348 = vrot.lane.b32.xlu0 %v327, 64
      %v349 = vpop.permute.xlu0 %348
      %350 = vrot.lane.b32.xlu0 %v330, 64
      %v351 = vpop.permute.xlu0 %350
      %v354 = vadd.f32 %v344, %v349
      %v355 = vadd.f32 %v345, %v351
      %v356 = vxor.u32 %v354, 2147483648
      %v357 = vxor.u32 %v355, 2147483648
      %v358 = vmul.f32 %v356, 1.442695
      %v359 = vpow.pop %v358
      %v360 = vmul.f32 %v357, 1.442695
      %v361 = vpow.pop %v360
      %v362 = vadd.f32 %v359, 1.0
      %v363 = vadd.f32 %v361, 1.0
      %v364 = vrcp.pop %v362
      %v365 = vmul.f32 %v362, %v364
      %v366 = vsub.f32 1.0, %v365
      %v367 = vmul.f32 %v364, %v366
      %v368 = vadd.f32 %v364, %v367
      %vm369 = vweird.f32 %v362
      %vm370 = vweird.f32 %v364
      %vm371 = vmor %vm369, %vm370
      %v372 = vsel %vm371, %v364, %v368
      %v373 = vand.u32 2147483647, %v362
      %vm374 = vcmp.eq.f32.partialorder %v373, 8.507059e+37
      %v375 = vand.u32 %v362, 2147483648
      %v376 = vor.u32 1.1754944e-38, %v375
      %v377 = vsel %vm374, %v376, %v372
      %v378 = vmul.f32 1.0, %v377
      %v379 = vrcp.pop %v363
      %v380 = vmul.f32 %v363, %v379
      %v381 = vsub.f32 1.0, %v380
      %v382 = vmul.f32 %v379, %v381
      %v383 = vadd.f32 %v379, %v382
      %vm384 = vweird.f32 %v363
      %vm385 = vweird.f32 %v379
      %vm386 = vmor %vm384, %vm385
      %v387 = vsel %vm386, %v379, %v383
      %v388 = vand.u32 2147483647, %v363
      %vm389 = vcmp.eq.f32.partialorder %v388, 8.507059e+37
      %v390 = vand.u32 %v363, 2147483648
      %v391 = vor.u32 1.1754944e-38, %v390
      %v392 = vsel %vm389, %v391, %v387
      %v393 = vmul.f32 1.0, %v392
      %396 = vrot.lane.b32.xlu0 %v378, 96
      %v397 = vpop.permute.xlu0 %396
      %398 = vrot.lane.b32.xlu0 %v393, 96
      %v399 = vpop.permute.xlu0 %398
      %v402 = vmul.f32 %v332, %v397
      %v403 = vmul.f32 %v333, %v399
      %406 = vrot.lane.b32.xlu0 %v354, 64
      %v407 = vpop.permute.xlu0 %406
      %408 = vrot.lane.b32.xlu0 %v355, 64
      %v409 = vpop.permute.xlu0 %408
      %412 = vst.msk [vmem:[%s263] sm:$0xff] %vm302, %v407
      %413 = vst.msk [vmem:[%s263 + $0x8] sm:$0xff] %vm302, %v409
      %v414 = vlaneseq
      %v415 = vshrl.u32 %v414, 7
      %v416 = vadd.s32 %v415, 8
      %v417 = vstv %s265
      %v418 = vadd.s32 %v417, %v415
      %v419 = vadd.s32 %v417, %v416
      %vm420 = vcmp.lt.s32.totalorder %v418, 32
      %vm421 = vcmp.lt.s32.totalorder %v419, 32
      %v422 = vsel %vm420, 1, 0
      %v423 = vsel %vm421, 1, 0
      %v424 = vcvt.s32.f32 %v422
      %v425 = vcvt.s32.f32 %v423
      %v426 = vmul.f32 %v354, %v424
      %v427 = vmul.f32 %v355, %v425
      %v428 = vld [vmem:[%s8] sm:$0x1]
      %vm429 = vcmask 785920
      %v430 = vsel %vm429, %v426, 0.0
      %v431 = vsel %vm429, %v427, 0.0
      %v432 = vadd.f32 %v430, %v431
      %v433 = vrot.slane %v432, 4
      %v434 = vadd.f32 %v432, %v433
      %v435 = vrot.slane %v434, 2
      %v436 = vadd.f32 %v434, %v435
      %v437 = vrot.slane %v436, 1
      %v438 = vadd.f32 %v436, %v437
      %440 = vrot.lane.b32.xlu0 %v438, 64
      %v441 = vpop.permute.xlu0 %440
      %v443 = vadd.f32 %v428, %v441
      %vm444 = vcmask 253952
      %445 = vst.msk [vmem:[%s8] sm:$0x1] %vm444, %v443
      %v446 = vld [vmem:[%s8 + $0x1] sm:$0x1]
      %v447 = vmul.f32 %v426, %v354
      %v448 = vmul.f32 %v427, %v355
      %v449 = vsel %vm429, %v447, 0.0
      %v450 = vsel %vm429, %v448, 0.0
      %v451 = vadd.f32 %v449, %v450
      %v452 = vrot.slane %v451, 4
      %v453 = vadd.f32 %v451, %v452
      %v454 = vrot.slane %v453, 2
      %v455 = vadd.f32 %v453, %v454
      %v456 = vrot.slane %v455, 1
      %v457 = vadd.f32 %v455, %v456
      %459 = vrot.lane.b32.xlu0 %v457, 64
      %v460 = vpop.permute.xlu0 %459
      %v462 = vadd.f32 %v446, %v460
      %463 = vst.msk [vmem:[%s8 + $0x1] sm:$0x1] %vm444, %v462
      %466 = vrot.lane.b32.xlu0 %v402, 96
      %v467 = vpop.permute.xlu0 %466
      %468 = vrot.lane.b32.xlu0 %v403, 96
      %v469 = vpop.permute.xlu0 %468
      %472 = vst.msk [vmem:[#allocation4] sm:$0xff] %vm302, %v467
      %473 = vst.msk [vmem:[#allocation4 + $0x8] sm:$0xff] %vm302, %v469
      %vm474 = vcmask 523520
      %475 = vst.msk [vmem:[#allocation4] sm:$0xff] %vm474, %v397
      %476 = vst.msk [vmem:[#allocation4 + $0x8] sm:$0xff] %vm474, %v399
      loop: start=0, step=1, limit=16
      $region48: #{res_gated_graph_conv.5} parent=35 // loop_pre_header
        _
      $region49: #{res_gated_graph_conv.5} parent=35 // loop_header
        %s478 = sphi 0, %s482
        %p479 = scmp.ge.s32.totalorder %s478, 16
      $region50: #{res_gated_graph_conv.5} parent=35 // loop_header_branch
        %481 = sbr.rel (%p479) target = $region54
      $region51: #{res_gated_graph_conv.5} parent=35 // loop_body
        %s483 = sadd.s32 %s265, %s478
        %p484 = scmp.lt.s32.totalorder %s483, 32
        // Predicated region
        $region55: #{res_gated_graph_conv.5} parent=51 // pred_check
          %p485 = pneg %p484
        $region56: #{res_gated_graph_conv.5} parent=51 // pred_check_branch
          %487 = sbr.rel (%p485) target = $region58
        $region57: #{res_gated_graph_conv.5} parent=51 // pred_region
          %s488 = sld [smem:[#allocation7 + %s483]]
          %s489 = scalar_lea.vmem %s7, %s488
          %v490 = vld [vmem:[%s489] sm:$0x1]
          %s491 = scalar_lea.vmem [#allocation4], %s478
          %v492 = vld [vmem:[%s491] sm:$0x1]
          %v493 = vadd.f32 %v490, %v492
          %vm494 = vcmask 516096
          %495 = vst.msk [vmem:[%s489] sm:$0x1] %vm494, %v493
        $region58: #{res_gated_graph_conv.5} parent=51 // pred_fallthru
          _
      $region52: #{res_gated_graph_conv.5} parent=35 // loop_footer
        %s482 = sadd.s32 1, %s478
      $region53: #{res_gated_graph_conv.5} parent=35 // loop_footer_branch
        %477 = sbr.rel target = $region49
      $region54: #{res_gated_graph_conv.5} parent=35 // loop_exit
        _
      %s496 = smul.u32 2, %s33
      %p497 = scmp.lt.s32.totalorder %s496, 3
      %s498 = scalar_select %p497, %s496, 3
      %s499 = smul.addr %s498, 8
      %s500 = scalar_lea.vmem %s6, %s499
      // Predicated region
      $region59: #{res_gated_graph_conv.5} parent=35 // pred_check
        %p501 = pneg %p140
      $region60: #{res_gated_graph_conv.5} parent=35 // pred_check_branch
        %503 = sbr.rel (%p501) target = $region62
      $region61: #{res_gated_graph_conv.5} parent=35 // pred_region
        %s504 = smul.u32 2, %s33
      $region62: #{res_gated_graph_conv.5} parent=35 // pred_fallthru
        _
      // Predicated region
      $region63: #{res_gated_graph_conv.5} parent=35 // pred_check
        %p505 = pneg %p161
      $region64: #{res_gated_graph_conv.5} parent=35 // pred_check_branch
        %507 = sbr.rel (%p505) target = $region66
      $region65: #{res_gated_graph_conv.5} parent=35 // pred_region
        _
      $region66: #{res_gated_graph_conv.5} parent=35 // pred_fallthru
        _
      // Predicated region
      $region67: #{res_gated_graph_conv.5} parent=35 // pred_check
        %p508 = pneg %p182
      $region68: #{res_gated_graph_conv.5} parent=35 // pred_check_branch
        %510 = sbr.rel (%p508) target = $region70
      $region69: #{res_gated_graph_conv.5} parent=35 // pred_region
        _
      $region70: #{res_gated_graph_conv.5} parent=35 // pred_fallthru
        _
      // Predicated region
      $region71: #{res_gated_graph_conv.5} parent=35 // pred_check
        %p511 = pneg %p161
      $region72: #{res_gated_graph_conv.5} parent=35 // pred_check_branch
        %513 = sbr.rel (%p511) target = $region74
      $region73: #{res_gated_graph_conv.5} parent=35 // pred_region
        _
      $region74: #{res_gated_graph_conv.5} parent=35 // pred_fallthru
        _
      // Predicated region
      $region75: #{res_gated_graph_conv.5} parent=35 // pred_check
        %p514 = pneg %p182
      $region76: #{res_gated_graph_conv.5} parent=35 // pred_check_branch
        %516 = sbr.rel (%p514) target = $region78
      $region77: #{res_gated_graph_conv.5} parent=35 // pred_region
        _
      $region78: #{res_gated_graph_conv.5} parent=35 // pred_fallthru
        _
    $region36: #{res_gated_graph_conv.5} parent=5 // pred_fallthru
      _
    %p517 = scmp.le.s32.totalorder 2, %s28
    // Predicated region
    $region79: #{res_gated_graph_conv.5} parent=5 // pred_check
      %p518 = pneg %p517
    $region80: #{res_gated_graph_conv.5} parent=5 // pred_check_branch
      %520 = sbr.rel (%p518) target = $region82
    $region81: #{res_gated_graph_conv.5} parent=5 // pred_region
      %s521 = ssub.s32 %s28, 2
      // Predicated region
      $region83: #{res_gated_graph_conv.5} parent=81 // pred_check
        %p522 = pneg %p146
      $region84: #{res_gated_graph_conv.5} parent=81 // pred_check_branch
        %524 = sbr.rel (%p522) target = $region86
      $region85: #{res_gated_graph_conv.5} parent=81 // pred_region
        %s525 = smul.u32 2, %s34
        %p526 = scmp.lt.s32.totalorder %s525, 3
        %s527 = scalar_select %p526, %s525, 3
        %s528 = smul.addr %s527, 8
        %s529 = scalar_lea.vmem %s6, %s528
      $region86: #{res_gated_graph_conv.5} parent=81 // pred_fallthru
        _
    $region82: #{res_gated_graph_conv.5} parent=5 // pred_fallthru
      _
  $region6: #{res_gated_graph_conv.5} parent=0 // loop_footer
    %s32 = sadd.s32 1, %s28
  $region7: #{res_gated_graph_conv.5} parent=0 // loop_footer_branch
    %27 = sbr.rel target = $region3
  $region8: #{res_gated_graph_conv.5} parent=0 // loop_exit
    _

// kernel: res_gated_graph_conv.6
$region0: #{res_gated_graph_conv.6}
  #allocation0 [shape = 'u32[]', space=smem, size = 0x4, offset = 0x4, fixed_abs, tag = 'smem constant byte address 0x4 - core index']
  #allocation1 [shape = 'u32[72,128]{1,0:T(1,128)}', space=vmem, size = 0x9000, scoped, tag = 'internal scratch']
  #allocation2 [shape = 'f32[2,32]{1,0:T(2,128)}', space=vmem, size = 0x400, scoped, tag = 'scratch operand']
  %s0 = inlined_call_operand.vmem [shape: f32[16,128], index: 0, kind: input, shape index: {}]
  %s1 = inlined_call_operand.vmem [shape: f32[16,64], index: 1, kind: input, shape index: {}]
  %s2 = inlined_call_operand.vmem [shape: f32[16,32], index: 2, kind: input, shape index: {}]
  %s3 = inlined_call_operand.vmem [shape: f32[1,32], index: 3, kind: input, shape index: {}]
  %s4 = inlined_call_operand.vmem [shape: f32[1,32], index: 4, kind: input, shape index: {}]
  %s5 = inlined_call_operand.hbm [shape: f32[16,32], index: 5, kind: output, shape index: {}]
  %s6 = sld [smem:[#allocation0]]
  $region65: #{res_gated_graph_conv.6} parent=0
    _
  %s8 = ssub.s32 1, %s6
  %s9 = scalar_select 0, %s8, %s6
  $region1: #{res_gated_graph_conv.6} parent=0
    #allocation3 [shape = 'u8[8192]{0}', space=vmem, size = 0x2000, scoped, tag = 'output window, operand 0']
    #allocation4 [shape = 's32[2]{0}', space=sflag, size = 0x8, scoped, tag = 'scoped memory for res_gated_graph_conv.6']
    %10 = vsyncpa [#allocation4], 0
    %s11 = scalar_lea.sflag [#allocation4], 1
    %12 = vsyncpa %s11, 0
    loop: start=0, step=1, limit=6
    $region2: #{res_gated_graph_conv.6} parent=1 // loop_pre_header
      _
    $region3: #{res_gated_graph_conv.6} parent=1 // loop_header
      %s14 = sphi 0, %s18
      %p15 = scmp.ge.s32.totalorder %s14, 6
      %s21 = sphi 0, %s33
      %s22 = sphi 0, %s29
      %s23 = sphi 0, %s21
      %s24 = sphi 0, %s22
      %s25 = sphi 0, %s23
      %s26 = sphi 0, %s24
      %s36 = sphi 0, %s38
      %s39 = sphi 0, %s36
      %s40 = sphi 0, %s39
      %s56 = sphi 0, %s40
      %s62 = sphi 0, %s64
      %s65 = sphi 0, %s62
      %s66 = sphi 0, %s65
      %s82 = sphi 0, %s66
      %s88 = sphi 0, %s90
      %s91 = sphi 0, %s88
      %s92 = sphi 0, %s91
      %s108 = sphi 0, %s92
      %s112 = sphi 0, %s112
      %s114 = sphi 0, %s112
      %s115 = sphi 0, %s114
      %s129 = sphi 0, %s115
      %s133 = sphi 0, %s133
      %s135 = sphi 0, %s133
      %s136 = sphi 0, %s135
      %s150 = sphi 0, %s136
      %s156 = sphi 0, %s158
      %s159 = sphi 0, %s156
      %s160 = sphi 0, %s159
      %s176 = sphi 0, %s160
    $region4: #{res_gated_graph_conv.6} parent=1 // loop_header_branch
      %17 = sbr.rel (%p15) target = $region8
    $region5: #{res_gated_graph_conv.6} parent=1 // loop_body
      %s19 = ssub.s32 %s14, 1
      %s20 = ssub.s32 %s14, 2
      %s27 = sadd.s32 1, %s22
      %p28 = scmp.ge.s32.totalorder %s27, 2
      %s29 = scalar_select %p28, 0, %s27
      %s30 = sadd.s32 1, %s21
      %s31 = scalar_select %p28, %s30, %s21
      %p32 = scmp.ge.s32.totalorder %s31, 2
      %s33 = scalar_select %p32, 0, %s31
      %s34 = ssub.s32 %s22, %s29
      %p35 = scmp.eq.s32.totalorder %s34, 0
      %s37 = sadd.s32 %s36, 1
      %s38 = scalar_select %p35, %s36, %s37
      %p41 = pneg %p35
      %p42 = scmp.eq.s32.totalorder %s14, 3
      %p43 = por %p41, %p42
      %p44 = scmp.ne.s32.totalorder %s36, %s39
      %p45 = scmp.eq.s32.totalorder %s14, 0
      %p46 = por %p44, %p45
      %p47 = scmp.ne.s32.totalorder %s36, %s39
      %p48 = scmp.eq.s32.totalorder %s19, 3
      %p49 = por %p47, %p48
      %p50 = scmp.ne.s32.totalorder %s39, %s40
      %p51 = scmp.eq.s32.totalorder %s19, 0
      %p52 = por %p50, %p51
      %p53 = scmp.ne.s32.totalorder %s39, %s40
      %p54 = scmp.eq.s32.totalorder %s20, 3
      %p55 = por %p53, %p54
      %p57 = scmp.ne.s32.totalorder %s40, %s56
      %p58 = scmp.eq.s32.totalorder %s20, 0
      %p59 = por %p57, %p58
      %s60 = ssub.s32 %s22, %s29
      %p61 = scmp.eq.s32.totalorder %s60, 0
      %s63 = sadd.s32 %s62, 1
      %s64 = scalar_select %p61, %s62, %s63
      %p67 = pneg %p61
      %p68 = scmp.eq.s32.totalorder %s14, 3
      %p69 = por %p67, %p68
      %p70 = scmp.ne.s32.totalorder %s62, %s65
      %p71 = scmp.eq.s32.totalorder %s14, 0
      %p72 = por %p70, %p71
      %p73 = scmp.ne.s32.totalorder %s62, %s65
      %p74 = scmp.eq.s32.totalorder %s19, 3
      %p75 = por %p73, %p74
      %p76 = scmp.ne.s32.totalorder %s65, %s66
      %p77 = scmp.eq.s32.totalorder %s19, 0
      %p78 = por %p76, %p77
      %p79 = scmp.ne.s32.totalorder %s65, %s66
      %p80 = scmp.eq.s32.totalorder %s20, 3
      %p81 = por %p79, %p80
      %p83 = scmp.ne.s32.totalorder %s66, %s82
      %p84 = scmp.eq.s32.totalorder %s20, 0
      %p85 = por %p83, %p84
      %s86 = ssub.s32 %s22, %s29
      %p87 = scmp.eq.s32.totalorder %s86, 0
      %s89 = sadd.s32 %s88, 1
      %s90 = scalar_select %p87, %s88, %s89
      %p93 = pneg %p87
      %p94 = scmp.eq.s32.totalorder %s14, 3
      %p95 = por %p93, %p94
      %p96 = scmp.ne.s32.totalorder %s88, %s91
      %p97 = scmp.eq.s32.totalorder %s14, 0
      %p98 = por %p96, %p97
      %p99 = scmp.ne.s32.totalorder %s88, %s91
      %p100 = scmp.eq.s32.totalorder %s19, 3
      %p101 = por %p99, %p100
      %p102 = scmp.ne.s32.totalorder %s91, %s92
      %p103 = scmp.eq.s32.totalorder %s19, 0
      %p104 = por %p102, %p103
      %p105 = scmp.ne.s32.totalorder %s91, %s92
      %p106 = scmp.eq.s32.totalorder %s20, 3
      %p107 = por %p105, %p106
      %p109 = scmp.ne.s32.totalorder %s92, %s108
      %p110 = scmp.eq.s32.totalorder %s20, 0
      %p111 = por %p109, %p110
      %s113 = sadd.s32 %s112, 1
      %p116 = scmp.eq.s32.totalorder %s14, 3
      %p117 = scmp.ne.s32.totalorder %s112, %s114
      %p118 = scmp.eq.s32.totalorder %s14, 0
      %p119 = por %p117, %p118
      %p120 = scmp.ne.s32.totalorder %s112, %s114
      %p121 = scmp.eq.s32.totalorder %s19, 3
      %p122 = por %p120, %p121
      %p123 = scmp.ne.s32.totalorder %s114, %s115
      %p124 = scmp.eq.s32.totalorder %s19, 0
      %p125 = por %p123, %p124
      %p126 = scmp.ne.s32.totalorder %s114, %s115
      %p127 = scmp.eq.s32.totalorder %s20, 3
      %p128 = por %p126, %p127
      %p130 = scmp.ne.s32.totalorder %s115, %s129
      %p131 = scmp.eq.s32.totalorder %s20, 0
      %p132 = por %p130, %p131
      %s134 = sadd.s32 %s133, 1
      %p137 = scmp.eq.s32.totalorder %s14, 3
      %p138 = scmp.ne.s32.totalorder %s133, %s135
      %p139 = scmp.eq.s32.totalorder %s14, 0
      %p140 = por %p138, %p139
      %p141 = scmp.ne.s32.totalorder %s133, %s135
      %p142 = scmp.eq.s32.totalorder %s19, 3
      %p143 = por %p141, %p142
      %p144 = scmp.ne.s32.totalorder %s135, %s136
      %p145 = scmp.eq.s32.totalorder %s19, 0
      %p146 = por %p144, %p145
      %p147 = scmp.ne.s32.totalorder %s135, %s136
      %p148 = scmp.eq.s32.totalorder %s20, 3
      %p149 = por %p147, %p148
      %p151 = scmp.ne.s32.totalorder %s136, %s150
      %p152 = scmp.eq.s32.totalorder %s20, 0
      %p153 = por %p151, %p152
      %s154 = ssub.s32 %s22, %s29
      %p155 = scmp.eq.s32.totalorder %s154, 0
      %s157 = sadd.s32 %s156, 1
      %s158 = scalar_select %p155, %s156, %s157
      %p161 = pneg %p155
      %p162 = scmp.eq.s32.totalorder %s14, 3
      %p163 = por %p161, %p162
      %p164 = scmp.ne.s32.totalorder %s156, %s159
      %p165 = scmp.eq.s32.totalorder %s14, 0
      %p166 = por %p164, %p165
      %p167 = scmp.ne.s32.totalorder %s156, %s159
      %p168 = scmp.eq.s32.totalorder %s19, 3
      %p169 = por %p167, %p168
      %p170 = scmp.ne.s32.totalorder %s159, %s160
      %p171 = scmp.eq.s32.totalorder %s19, 0
      %p172 = por %p170, %p171
      %p173 = scmp.ne.s32.totalorder %s159, %s160
      %p174 = scmp.eq.s32.totalorder %s20, 3
      %p175 = por %p173, %p174
      %p177 = scmp.ne.s32.totalorder %s160, %s176
      %p178 = scmp.eq.s32.totalorder %s20, 0
      %p179 = por %p177, %p178
      %p180 = scmp.le.s32.totalorder 1, %s14
      %p181 = scmp.lt.s32.totalorder %s14, 5
      %p182 = pnand %p180, %p181
      %p183 = pneg %p182
      // Predicated region
      $region9: #{res_gated_graph_conv.6} parent=5 // pred_check
        _
      $region10: #{res_gated_graph_conv.6} parent=5 // pred_check_branch
        %185 = sbr.rel (%p182) target = $region12
      $region11: #{res_gated_graph_conv.6} parent=5 // pred_region
        %s186 = ssub.s32 %s14, 1
        // Predicated region
        $region13: #{res_gated_graph_conv.6} parent=11 // pred_check
          %p187 = pneg %p125
        $region14: #{res_gated_graph_conv.6} parent=11 // pred_check_branch
          %189 = sbr.rel (%p187) target = $region16
        $region15: #{res_gated_graph_conv.6} parent=11 // pred_region
          _
        $region16: #{res_gated_graph_conv.6} parent=11 // pred_fallthru
          _
        // Predicated region
        $region17: #{res_gated_graph_conv.6} parent=11 // pred_check
          %p190 = pneg %p146
        $region18: #{res_gated_graph_conv.6} parent=11 // pred_check_branch
          %192 = sbr.rel (%p190) target = $region20
        $region19: #{res_gated_graph_conv.6} parent=11 // pred_region
          _
        $region20: #{res_gated_graph_conv.6} parent=11 // pred_fallthru
          _
      $region12: #{res_gated_graph_conv.6} parent=5 // pred_fallthru
        _
      %p193 = scmp.lt.s32.totalorder %s14, 4
      // Predicated region
      $region21: #{res_gated_graph_conv.6} parent=5 // pred_check
        %p194 = pneg %p193
      $region22: #{res_gated_graph_conv.6} parent=5 // pred_check_branch
        %196 = sbr.rel (%p194) target = $region24
      $region23: #{res_gated_graph_conv.6} parent=5 // pred_region
        // Predicated region
        $region25: #{res_gated_graph_conv.6} parent=23 // pred_check
          %p197 = pneg %p46
        $region26: #{res_gated_graph_conv.6} parent=23 // pred_check_branch
          %199 = sbr.rel (%p197) target = $region28
        $region27: #{res_gated_graph_conv.6} parent=23 // pred_region
          %p200 = scmp.lt.s32.totalorder %s22, 1
          %s201 = scalar_select %p200, %s22, 1
          %s202 = smul.addr %s201, 8
          %s203 = scalar_lea.vmem %s0, %s202
        $region28: #{res_gated_graph_conv.6} parent=23 // pred_fallthru
          _
        // Predicated region
        $region29: #{res_gated_graph_conv.6} parent=23 // pred_check
          %p204 = pneg %p72
        $region30: #{res_gated_graph_conv.6} parent=23 // pred_check_branch
          %206 = sbr.rel (%p204) target = $region32
        $region31: #{res_gated_graph_conv.6} parent=23 // pred_region
          %p207 = scmp.lt.s32.totalorder %s22, 1
          %s208 = scalar_select %p207, %s22, 1
          %s209 = smul.addr %s208, 8
          %s210 = scalar_lea.vmem %s1, %s209
        $region32: #{res_gated_graph_conv.6} parent=23 // pred_fallthru
          _
        // Predicated region
        $region33: #{res_gated_graph_conv.6} parent=23 // pred_check
          %p211 = pneg %p98
        $region34: #{res_gated_graph_conv.6} parent=23 // pred_check_branch
          %213 = sbr.rel (%p211) target = $region36
        $region35: #{res_gated_graph_conv.6} parent=23 // pred_region
          %p214 = scmp.lt.s32.totalorder %s22, 1
          %s215 = scalar_select %p214, %s22, 1
          %s216 = smul.addr %s215, 8
          %s217 = scalar_lea.vmem %s2, %s216
        $region36: #{res_gated_graph_conv.6} parent=23 // pred_fallthru
          _
      $region24: #{res_gated_graph_conv.6} parent=5 // pred_fallthru
        _
      %p218 = scmp.le.s32.totalorder 1, %s14
      %p219 = scmp.lt.s32.totalorder %s14, 5
      %p220 = pnand %p218, %p219
      %p221 = pneg %p220
      // Predicated region
      $region37: #{res_gated_graph_conv.6} parent=5 // pred_check
        _
      $region38: #{res_gated_graph_conv.6} parent=5 // pred_check_branch
        %223 = sbr.rel (%p220) target = $region40
      $region39: #{res_gated_graph_conv.6} parent=5 // pred_region
        %s224 = ssub.s32 %s14, 1
        %p225 = scmp.lt.s32.totalorder %s24, 1
        %s226 = scalar_select %p225, %s24, 1
        %s227 = smul.addr %s226, 8
        %s228 = scalar_lea.vmem %s0, %s227
        %p229 = pneg %p52
        %p230 = pneg %p49
        %p231 = scmp.lt.s32.totalorder %s24, 1
        %s232 = scalar_select %p231, %s24, 1
        %s233 = smul.addr %s232, 8
        %s234 = scalar_lea.vmem %s1, %s233
        %p235 = pneg %p78
        %p236 = pneg %p75
        %p237 = scmp.lt.s32.totalorder %s24, 1
        %s238 = scalar_select %p237, %s24, 1
        %s239 = smul.addr %s238, 8
        %s240 = scalar_lea.vmem %s2, %s239
        %p241 = pneg %p104
        %p242 = pneg %p101
        %p243 = pneg %p125
        %p244 = pneg %p122
        %p245 = pneg %p146
        %p246 = pneg %p143
        %p247 = pneg %p172
        %p248 = pneg %p169
        %s249 = sand.u32 %s159, 1
        %s250 = scalar_lea.sflag [#allocation4], %s249
        %s251 = sand.u32 %s159, 1
        %s252 = smul.addr %s251, 8
        %s253 = scalar_lea.vmem [#allocation3], %s252
        %p254 = scmp.lt.s32.totalorder %s24, 1
        %s255 = scalar_select %p254, %s24, 1
        %s256 = smul.addr %s255, 8
        %s257 = scalar_lea.vmem %s0, %s256
        %p258 = scmp.lt.s32.totalorder %s24, 1
        %s259 = scalar_select %p258, %s24, 1
        %s260 = smul.addr %s259, 8
        %s261 = scalar_lea.vmem %s1, %s260
        %p262 = scmp.lt.s32.totalorder %s24, 1
        %s263 = scalar_select %p262, %s24, 1
        %s264 = smul.addr %s263, 8
        %s265 = scalar_lea.vmem %s2, %s264
        %v266 = vld [vmem:[%s257] sm:$0xff]
        %v267 = vld [vmem:[%s261] sm:$0xff]
        %v268 = vadd.f32 %v267, 1e-06
        %270 = vrot.lane.b32.xlu0 %v268, 96
        %v271 = vpop.permute.xlu0 %270
        %v273 = vrcp.pop %v271
        %v274 = vmul.f32 %v271, %v273
        %v275 = vsub.f32 1.0, %v274
        %v276 = vmul.f32 %v273, %v275
        %v277 = vadd.f32 %v273, %v276
        %vm278 = vweird.f32 %v271
        %vm279 = vweird.f32 %v273
        %vm280 = vmor %vm278, %vm279
        %v281 = vsel %vm280, %v273, %v277
        %v282 = vand.u32 2147483647, %v271
        %vm283 = vcmp.eq.f32.partialorder %v282, 8.507059e+37
        %v284 = vand.u32 %v271, 2147483648
        %v285 = vor.u32 1.1754944e-38, %v284
        %v286 = vsel %vm283, %v285, %v281
        %v287 = vmul.f32 %v267, %v286
        %v288 = vadd.f32 %v266, %v287
        %p289 = scmp.eq.s32.totalorder %s23, 0
        // Predicated region
        $region41: #{res_gated_graph_conv.6} parent=39 // pred_check
          %p290 = pneg %p289
        $region42: #{res_gated_graph_conv.6} parent=39 // pred_check_branch
          %292 = sbr.rel (%p290) target = $region44
        $region43: #{res_gated_graph_conv.6} parent=39 // pred_region
          %p293 = scmp.eq.s32.totalorder %s24, 0
          // Predicated region
          $region45: #{res_gated_graph_conv.6} parent=43 // pred_check
            %p294 = pneg %p293
          $region46: #{res_gated_graph_conv.6} parent=43 // pred_check_branch
            %296 = sbr.rel (%p294) target = $region48
          $region47: #{res_gated_graph_conv.6} parent=43 // pred_region
            %vm297 = vcmask 254976
            %298 = vst.msk [vmem:[#allocation2] sm:$0x3] %vm297, 0.0
          $region48: #{res_gated_graph_conv.6} parent=43 // pred_fallthru
            _
          %s299 = smul.u32 %s24, 8
          %v300 = vlaneseq
          %v301 = vshrl.u32 %v300, 7
          %v302 = vstv %s299
          %v303 = vadd.s32 %v302, %v301
          %vm304 = vcmp.lt.s32.totalorder %v303, 16
          %v305 = vsel %vm304, 1, 0
          %v306 = vcvt.s32.f32 %v305
          %v307 = vmul.f32 %v288, %v306
          %v308 = vld [vmem:[#allocation2] sm:$0x1]
          %vm309 = vcmask 261120
          %v310 = vsel %vm309, %v307, 0.0
          %v311 = vrot.slane %v310, 4
          %v312 = vadd.f32 %v310, %v311
          %v313 = vrot.slane %v312, 2
          %v314 = vadd.f32 %v312, %v313
          %v315 = vrot.slane %v314, 1
          %v316 = vadd.f32 %v314, %v315
          %v317 = vadd.f32 %v308, %v316
          %vm318 = vcmask 253952
          %319 = vst.msk [vmem:[#allocation2] sm:$0x1] %vm318, %v317
          %v320 = vld [vmem:[#allocation2 + $0x1] sm:$0x1]
          %v321 = vmul.f32 %v307, %v288
          %v322 = vsel %vm309, %v321, 0.0
          %v323 = vrot.slane %v322, 4
          %v324 = vadd.f32 %v322, %v323
          %v325 = vrot.slane %v324, 2
          %v326 = vadd.f32 %v324, %v325
          %v327 = vrot.slane %v326, 1
          %v328 = vadd.f32 %v326, %v327
          %v329 = vadd.f32 %v320, %v328
          %330 = vst.msk [vmem:[#allocation2 + $0x1] sm:$0x1] %vm318, %v329
          %331 = vst.msk [vmem:[%s253] sm:$0xff] %vm309, %v288
        $region44: #{res_gated_graph_conv.6} parent=39 // pred_fallthru
          _
        %p332 = scmp.eq.s32.totalorder %s23, 1
        // Predicated region
        $region49: #{res_gated_graph_conv.6} parent=39 // pred_check
          %p333 = pneg %p332
        $region50: #{res_gated_graph_conv.6} parent=39 // pred_check_branch
          %335 = sbr.rel (%p333) target = $region52
        $region51: #{res_gated_graph_conv.6} parent=39 // pred_region
          %v336 = vld [vmem:[#allocation2] sm:$0x1]
          %v337 = vmul.f32 %v336, 0.0625
          %v338 = vld [vmem:[#allocation2 + $0x1] sm:$0x1]
          %v339 = vmul.f32 %v338, 0.0625
          %v340 = vmul.f32 %v337, %v337
          %v341 = vsub.f32 %v339, %v340
          %v342 = vperm.slane %v337, 0
          %v343 = vsub.f32 %v288, %v342
          %v344 = vadd.f32 %v341, 1e-05
          %v345 = vrsqrt.pop %v344
          %v346 = vmul.f32 %v345, %v344
          %v347 = vmul.f32 %v346, %v345
          %v348 = vmul.f32 0.5, %v347
          %v349 = vsub.f32 1.5, %v348
          %v350 = vmul.f32 %v345, %v349
          %vm351 = vweird.f32 %v344
          %vm352 = vweird.f32 %v345
          %vm353 = vmor %vm351, %vm352
          %v354 = vsel %vm353, %v345, %v350
          %v355 = vperm.slane %v354, 0
          %v356 = vmul.f32 %v343, %v355
          %v357 = vld [vmem:[%s3] sm:$0x1]
          %v359 = vperm.slane %v357, 0
          %v361 = vmul.f32 %v356, %v359
          %v362 = vld [vmem:[%s4] sm:$0x1]
          %v364 = vperm.slane %v362, 0
          %v366 = vadd.f32 %v361, %v364
          %v367 = vmax.f32 %v366, 0.0
          %v368 = vld [vmem:[%s265] sm:$0xff]
          %v369 = vadd.f32 %v368, %v367
          %vm370 = vcmask 261120
          %371 = vst.msk [vmem:[%s253] sm:$0xff] %vm370, %v369
        $region52: #{res_gated_graph_conv.6} parent=39 // pred_fallthru
          _
        %s372 = sand.u32 %s159, 1
        %s373 = scalar_lea.sflag [#allocation4], %s372
        %s374 = sand.u32 %s159, 1
        %s375 = smul.addr %s374, 8
        %s376 = scalar_lea.vmem [#allocation3], %s375
        // Predicated region
        $region53: #{res_gated_graph_conv.6} parent=39 // pred_check
          %p377 = pneg %p169
        $region54: #{res_gated_graph_conv.6} parent=39 // pred_check_branch
          %379 = sbr.rel (%p377) target = $region56
        $region55: #{res_gated_graph_conv.6} parent=39 // pred_region
          %381 = vsyncadd %s373, 0
          %s382 = smul.addr %s24, 8
          %s383 = scalar_lea.hbm %s5, %s382
          %s385 = sshll.u32 %s376, 4
          %s386 = int_to_ptr.vmem [resolvable:$true] %s385
          %s387 = sshll.u32 %s383, 4
          %s388 = int_to_ptr.hbm [resolvable:$true] %s387
          %390 = dma.vmem_to_hbm [thread:$0]  %s386, 128, %s388, %s373
        $region56: #{res_gated_graph_conv.6} parent=39 // pred_fallthru
          _
      $region40: #{res_gated_graph_conv.6} parent=5 // pred_fallthru
        _
      %p391 = scmp.le.s32.totalorder 2, %s14
      // Predicated region
      $region57: #{res_gated_graph_conv.6} parent=5 // pred_check
        %p392 = pneg %p391
      $region58: #{res_gated_graph_conv.6} parent=5 // pred_check_branch
        %394 = sbr.rel (%p392) target = $region60
      $region59: #{res_gated_graph_conv.6} parent=5 // pred_region
        %s395 = ssub.s32 %s14, 2
        // Predicated region
        $region61: #{res_gated_graph_conv.6} parent=59 // pred_check
          %p396 = pneg %p175
        $region62: #{res_gated_graph_conv.6} parent=59 // pred_check_branch
          %398 = sbr.rel (%p396) target = $region64
        $region63: #{res_gated_graph_conv.6} parent=59 // pred_region
          %s399 = sand.u32 %s160, 1
          %s400 = scalar_lea.sflag [#allocation4], %s399
          %s401 = sand.u32 %s160, 1
          %s402 = smul.addr %s401, 8
          %s403 = scalar_lea.vmem [#allocation3], %s402
          %405 = dma.done %s400, 128
        $region64: #{res_gated_graph_conv.6} parent=59 // pred_fallthru
          _
      $region60: #{res_gated_graph_conv.6} parent=5 // pred_fallthru
        _
    $region6: #{res_gated_graph_conv.6} parent=1 // loop_footer
      %s18 = sadd.s32 1, %s14
    $region7: #{res_gated_graph_conv.6} parent=1 // loop_footer_branch
      %13 = sbr.rel target = $region3
    $region8: #{res_gated_graph_conv.6} parent=1 // loop_exit
      _
    %406 = vsyncpa [#allocation4], 1
    %s407 = scalar_lea.sflag [#allocation4], 1
    %408 = vsyncpa %s407, 1

</llo_original>
